<compile_context>
chip_gen: v6e
topology: v6e:2x2x1
jax: 0.10.0
libtpu: 0.0.40
codegen_flags: <defaults>
</compile_context>

<pallas_src>
import functools

import jax
import jax.numpy as jnp
from jax import lax
from jax.experimental import pallas as pl
from jax.experimental.pallas import tpu as pltpu


def _layer_norm(y, gamma, beta, eps=1e-6):
    # Matches nn.LayerNorm(d_model, eps=1e-06) in the PyTorch module.
    mu = jnp.mean(y, axis=-1, keepdims=True)
    var = jnp.mean((y - mu) ** 2, axis=-1, keepdims=True)
    return (y - mu) * lax.rsqrt(var + eps) * gamma + beta


def encoder_layer_kernel(x_ref, mask_ref,
                         wqkv_ref, wo_ref, bo_ref,
                         g1_ref, be1_ref,
                         w1_ref, b1_ref, w2_ref, b2_ref,
                         g2_ref, be2_ref,
                         o_ref,
                         oheads_ref,
                         *, n_heads, d_k):
    f32 = jnp.float32
    bf16 = jnp.bfloat16
    D = n_heads * d_k

    x = x_ref[0]                                   # (S, D) f32
    S = x.shape[0]

    # ---- fused QKV projection: one wide bf16 MXU matmul, f32 accumulation ----
    # 1/sqrt(d_k) is already folded into the Q weight columns (see prepare_params).
    qkv = jnp.dot(x.astype(bf16), wqkv_ref[...], preferred_element_type=f32)  # (S, 3D)

    # Additive key-mask bias; large finite negative so fully-masked rows don't NaN.
    mask_row = mask_ref[0]                                       # (1, S)
    bias = jnp.where(mask_row == 0, f32(-1e30), f32(0.0))        # (1, S)
    bias_full = jnp.broadcast_to(bias, (S, S))                   # hoisted out of loop

    # ---- per-head attention; head outputs land in an (S, D) scratch slab ----
    for h in range(n_heads):                       # static unroll (n_heads small)
        lo = h * d_k
        q = qkv[:, lo:lo + d_k].astype(bf16)                     # (S, d_k)
        k = qkv[:, D + lo:D + lo + d_k].astype(bf16)             # (S, d_k)
        v = qkv[:, 2 * D + lo:2 * D + lo + d_k].astype(bf16)     # (S, d_k)
        # q @ k^T without materializing k.T (MXU consumes stored layout).
        s = lax.dot_general(q, k, (((1,), (1,)), ((), ())),
                            preferred_element_type=f32) + bias_full   # (S, S)
        m = jnp.max(s, axis=-1, keepdims=True)
        e = jnp.exp(s - m)
        p = e * pl.reciprocal(jnp.sum(e, axis=-1, keepdims=True), approx=True)
        o_h = jnp.dot(p.astype(bf16), v, preferred_element_type=f32)  # (S, d_k)
        oheads_ref[:, lo:lo + d_k] = o_h.astype(bf16)

    # ---- single full-depth output projection (replaces per-head K-accum) ----
    attn = jnp.dot(oheads_ref[...], wo_ref[...],
                   preferred_element_type=f32) + bo_ref[0]            # (S, D)

    # Residual + LayerNorm (dropout = identity in eval mode).
    x1 = _layer_norm(x + attn, g1_ref[0], be1_ref[0])

    # ---- position-wise feed forward (bf16 MXU, f32 accumulation) ----
    x1_bf = x1.astype(bf16)
    h1 = jnp.maximum(
        jnp.dot(x1_bf, w1_ref[...], preferred_element_type=f32) + b1_ref[0], 0.0)
    ff = jnp.dot(h1.astype(bf16), w2_ref[...], preferred_element_type=f32) + b2_ref[0]

    o_ref[0] = _layer_norm(x1 + ff, g2_ref[0], be2_ref[0]).astype(o_ref.dtype)


def prepare_params(params, *, n_heads):
    """One-time parameter preparation (hoisted out of the per-call path):
    fold 1/sqrt(d_k) into the Q weights (in f32), fuse Q/K/V into one (D, 3D)
    matrix, and cast matmul weights to bf16 (halves weight DMA bytes / VMEM)."""
    d_model = params["wq"].shape[0]
    d_k = d_model // n_heads
    inv_scale = jnp.float32(1.0 / (float(d_k) ** 0.5))
    wq_scaled = params["wq"] * inv_scale           # f32 scale, then bf16 cast
    wqkv = jnp.concatenate([wq_scaled, params["wk"], params["wv"]],
                           axis=1).astype(jnp.bfloat16)
    return {
        "wqkv": wqkv,
        "wo": params["wo"].astype(jnp.bfloat16),
        "bo": params["bo"],
        "ln1_g": params["ln1_g"], "ln1_b": params["ln1_b"],
        "w1": params["w1"].astype(jnp.bfloat16), "b1": params["b1"],
        "w2": params["w2"].astype(jnp.bfloat16), "b2": params["b2"],
        "ln2_g": params["ln2_g"], "ln2_b": params["ln2_b"],
    }


def _const_spec(shape):
    """BlockSpec for a constant-index (weight/bias) operand.
    Single-buffered: its index_map never changes, so double-buffering only
    doubles resident VMEM. Falls back if pipeline_mode isn't supported."""
    idx = lambda b: (0,) * len(shape)
    try:
        return pl.BlockSpec(shape, idx, pipeline_mode=pl.Buffered(1))
    except TypeError:
        return pl.BlockSpec(shape, idx)


def attention_encoder_layer(x, mask, prepared, *, n_heads):
    """x: (B, S, D) f32, mask: (B, 1, S) f32, prepared = prepare_params(...).
    Returns (B, S, D) f32."""
    B, S, D = x.shape
    d_k = D // n_heads
    d_ff = prepared["w1"].shape[1]

    # Advisory cost estimate so XLA schedules around the custom call sensibly.
    flops = 2 * B * S * (3 * D * D + 2 * S * D + D * D + 2 * D * d_ff)
    bytes_accessed = (2 * B * S * D * 4 + B * S * 4
                      + (4 * D * D + 2 * D * d_ff) * 2
                      + (5 * D + d_ff) * 4)
    cost = pl.CostEstimate(flops=int(flops),
                           transcendentals=int(B * n_heads * S * S),
                           bytes_accessed=int(bytes_accessed))

    kernel = functools.partial(encoder_layer_kernel, n_heads=n_heads, d_k=d_k)
    return pl.pallas_call(
        kernel,
        out_shape=jax.ShapeDtypeStruct((B, S, D), jnp.float32),
        grid=(B,),
        in_specs=[
            pl.BlockSpec((1, S, D), lambda b: (b, 0, 0)),   # x
            pl.BlockSpec((1, 1, S), lambda b: (b, 0, 0)),   # mask
            _const_spec((D, 3 * D)),                        # fused W_qkv (bf16)
            _const_spec((D, D)),                            # W_o (bf16)
            _const_spec((1, D)),                            # b_o
            _const_spec((1, D)),                            # ln1 gamma
            _const_spec((1, D)),                            # ln1 beta
            _const_spec((D, d_ff)),                         # w1 (bf16)
            _const_spec((1, d_ff)),                         # b1
            _const_spec((d_ff, D)),                         # w2 (bf16)
            _const_spec((1, D)),                            # b2
            _const_spec((1, D)),                            # ln2 gamma
            _const_spec((1, D)),                            # ln2 beta
        ],
        out_specs=pl.BlockSpec((1, S, D), lambda b: (b, 0, 0)),
        scratch_shapes=[pltpu.VMEM((S, D), jnp.bfloat16)],  # per-head output slab
        compiler_params=pltpu.CompilerParams(
            dimension_semantics=("parallel",),
            vmem_limit_bytes=48 * 1024 * 1024),
        cost_estimate=cost,
    )(x, mask, prepared["wqkv"], prepared["wo"], prepared["bo"],
      prepared["ln1_g"], prepared["ln1_b"],
      prepared["w1"], prepared["b1"], prepared["w2"], prepared["b2"],
      prepared["ln2_g"], prepared["ln2_b"])


def reference_encoder_layer(x, mask, params, *, n_heads):
    """Pure-JAX f32 reference mirroring the PyTorch forward (eval mode)."""
    B, S, D = x.shape
    d_k = D // n_heads
    q = (x @ params["wq"]).reshape(B, S, n_heads, d_k).transpose(0, 2, 1, 3)
    k = (x @ params["wk"]).reshape(B, S, n_heads, d_k).transpose(0, 2, 1, 3)
    v = (x @ params["wv"]).reshape(B, S, n_heads, d_k).transpose(0, 2, 1, 3)
    scores = jnp.einsum("bhqd,bhkd->bhqk", q, k) / jnp.sqrt(jnp.float32(d_k))
    m4 = mask[:, None, :, :]                       # (B,1,1,S)
    scores = jnp.where(m4 == 0, -jnp.inf, scores)
    probs = jax.nn.softmax(scores, axis=-1)
    out = jnp.einsum("bhqk,bhkd->bhqd", probs, v)
    out = out.transpose(0, 2, 1, 3).reshape(B, S, D)
    out = out @ params["wo"] + params["bo"][0]
    x1 = _layer_norm(x + out, params["ln1_g"][0], params["ln1_b"][0])
    h1 = jax.nn.relu(x1 @ params["w1"] + params["b1"][0])
    ff = h1 @ params["w2"] + params["b2"][0]
    return _layer_norm(x1 + ff, params["ln2_g"][0], params["ln2_b"][0])


def init_params(key, d_model, n_heads, d_ff):
    ks = jax.random.split(key, 12)
    n = lambda k, shape, s=0.05: (s * jax.random.normal(k, shape)).astype(jnp.float32)
    return {
        "wq": n(ks[0], (d_model, d_model)),
        "wk": n(ks[1], (d_model, d_model)),
        "wv": n(ks[2], (d_model, d_model)),
        "wo": n(ks[3], (d_model, d_model)),
        "bo": n(ks[4], (1, d_model)),
        "ln1_g": 1.0 + n(ks[5], (1, d_model), 0.1),
        "ln1_b": n(ks[6], (1, d_model), 0.1),
        "w1": n(ks[7], (d_model, d_ff)),
        "b1": n(ks[8], (1, d_ff)),
        "w2": n(ks[9], (d_ff, d_model)),
        "b2": n(ks[10], (1, d_model)),
        "ln2_g": 1.0 + n(ks[11], (1, d_model), 0.1),
        "ln2_b": jnp.zeros((1, d_model), jnp.float32),
    }


if __name__ == "__main__":
    # Small but lane-dense shapes (D = 128 keeps output stores unmasked full-lane).
    B, S, D, H, DFF = 2, 16, 128, 4, 256

    key = jax.random.PRNGKey(0)
    kx, kp = jax.random.split(key)
    x = jax.random.normal(kx, (B, S, D), dtype=jnp.float32)
    # mask: (B, 1, S); 1 = attend, 0 = masked. Mask out last two keys of batch 1.
    mask = jnp.ones((B, 1, S), dtype=jnp.float32)
    mask = mask.at[1, 0, -2:].set(0.0)

    params = init_params(kp, D, H, DFF)
    prepared = prepare_params(params, n_heads=H)     # one-time weight prep

    out = attention_encoder_layer(x, mask, prepared, n_heads=H)
    out = jax.block_until_ready(out)

    ref = reference_encoder_layer(x, mask, params, n_heads=H)
    assert out.shape == (B, S, D)
    err = float(jnp.max(jnp.abs(out - ref)))
    # bf16 MXU path + approx reciprocal vs pure-f32 reference: a few 1e-2.
    assert jnp.allclose(out, ref, atol=5e-2, rtol=5e-2), f"max abs err {err}"

    print("KERNEL_OK")
</pallas_src>

<mosaic_0001>
module attributes {stable_mosaic.version = 11 : i64} {
  func.func @encoder_layer_kernel(%arg0: i32, %arg1: memref<1x16x128xf32, #tpu.memory_space<vmem>>, %arg2: memref<1x1x16xf32, #tpu.memory_space<vmem>>, %arg3: memref<128x384xbf16, #tpu.memory_space<vmem>>, %arg4: memref<128x128xbf16, #tpu.memory_space<vmem>>, %arg5: memref<1x128xf32, #tpu.memory_space<vmem>>, %arg6: memref<1x128xf32, #tpu.memory_space<vmem>>, %arg7: memref<1x128xf32, #tpu.memory_space<vmem>>, %arg8: memref<128x256xbf16, #tpu.memory_space<vmem>>, %arg9: memref<1x256xf32, #tpu.memory_space<vmem>>, %arg10: memref<256x128xbf16, #tpu.memory_space<vmem>>, %arg11: memref<1x128xf32, #tpu.memory_space<vmem>>, %arg12: memref<1x128xf32, #tpu.memory_space<vmem>>, %arg13: memref<1x128xf32, #tpu.memory_space<vmem>>, %arg14: memref<1x16x128xf32, #tpu.memory_space<vmem>>, %arg15: memref<16x128xbf16, #tpu.memory_space<vmem>>) attributes {dimension_semantics = [#tpu.dimension_semantics<parallel>], iteration_bounds = array<i64: 2>, scalar_prefetch = 0 : i64, scratch_operands = 1 : i64, tpu.core_type = #tpu.core_type<tc>, window_params = [{transform_indices = @transform_0, window_bounds = array<i64: 1, 16, 128>}, {transform_indices = @transform_1, window_bounds = array<i64: 1, 1, 16>}, {pipeline_mode = #tpu.pipeline_mode<synchronous>, transform_indices = @transform_2, window_bounds = array<i64: 128, 384>}, {pipeline_mode = #tpu.pipeline_mode<synchronous>, transform_indices = @transform_3, window_bounds = array<i64: 128, 128>}, {pipeline_mode = #tpu.pipeline_mode<synchronous>, transform_indices = @transform_4, window_bounds = array<i64: 1, 128>}, {pipeline_mode = #tpu.pipeline_mode<synchronous>, transform_indices = @transform_5, window_bounds = array<i64: 1, 128>}, {pipeline_mode = #tpu.pipeline_mode<synchronous>, transform_indices = @transform_6, window_bounds = array<i64: 1, 128>}, {pipeline_mode = #tpu.pipeline_mode<synchronous>, transform_indices = @transform_7, window_bounds = array<i64: 128, 256>}, {pipeline_mode = #tpu.pipeline_mode<synchronous>, transform_indices = @transform_8, window_bounds = array<i64: 1, 256>}, {pipeline_mode = #tpu.pipeline_mode<synchronous>, transform_indices = @transform_9, window_bounds = array<i64: 256, 128>}, {pipeline_mode = #tpu.pipeline_mode<synchronous>, transform_indices = @transform_10, window_bounds = array<i64: 1, 128>}, {pipeline_mode = #tpu.pipeline_mode<synchronous>, transform_indices = @transform_11, window_bounds = array<i64: 1, 128>}, {pipeline_mode = #tpu.pipeline_mode<synchronous>, transform_indices = @transform_12, window_bounds = array<i64: 1, 128>}, {transform_indices = @transform_13, window_bounds = array<i64: 1, 16, 128>}]} {
    %c0 = arith.constant 0 : index
    %c0_0 = arith.constant 0 : index
    %c0_1 = arith.constant 0 : index
    %0 = vector.load %arg1[%c0, %c0_0, %c0_1] : memref<1x16x128xf32, #tpu.memory_space<vmem>>, vector<1x16x128xf32>
    %1 = vector.shape_cast %0 : vector<1x16x128xf32> to vector<16x128xf32>
    %2 = arith.truncf %1 : vector<16x128xf32> to vector<16x128xbf16>
    %c0_2 = arith.constant 0 : index
    %c0_3 = arith.constant 0 : index
    %3 = vector.load %arg3[%c0_2, %c0_3] : memref<128x384xbf16, #tpu.memory_space<vmem>>, vector<128x384xbf16>
    %cst = arith.constant dense<0.000000e+00> : vector<16x384xf32>
    %4 = tpu.matmul %2, %3, %cst {dimension_numbers = #tpu.dot_dimension_numbers<[1], [0], [0], [1], [0, 0, 1, 1], [], []>} : vector<16x128xbf16>, vector<128x384xbf16>, vector<16x384xf32> -> vector<16x384xf32>
    %c0_4 = arith.constant 0 : index
    %c0_5 = arith.constant 0 : index
    %c0_6 = arith.constant 0 : index
    %5 = vector.load %arg2[%c0_4, %c0_5, %c0_6] : memref<1x1x16xf32, #tpu.memory_space<vmem>>, vector<1x1x16xf32>
    %6 = vector.shape_cast %5 : vector<1x1x16xf32> to vector<1x16xf32>
    %cst_7 = arith.constant 0.000000e+00 : f32
    %7 = vector.broadcast %cst_7 : f32 to vector<1x16xf32>
    %8 = arith.cmpf oeq, %6, %7 : vector<1x16xf32>
    %cst_8 = arith.constant -1.000000e+30 : f32
    %cst_9 = arith.constant 0.000000e+00 : f32
    %9 = vector.broadcast %cst_8 : f32 to vector<1x16xf32>
    %10 = vector.broadcast %cst_9 : f32 to vector<1x16xf32>
    %11 = arith.select %8, %9, %10 : vector<1x16xi1>, vector<1x16xf32>
    %12 = vector.shape_cast %11 : vector<1x16xf32> to vector<1x16xf32>
    %13 = vector.broadcast %12 : vector<1x16xf32> to vector<16x16xf32>
    %14 = vector.extract_strided_slice %4 {offsets = [0, 0], sizes = [16, 32], strides = [1, 1]} : vector<16x384xf32> to vector<16x32xf32>
    %15 = arith.truncf %14 : vector<16x32xf32> to vector<16x32xbf16>
    %16 = vector.extract_strided_slice %4 {offsets = [0, 128], sizes = [16, 32], strides = [1, 1]} : vector<16x384xf32> to vector<16x32xf32>
    %17 = arith.truncf %16 : vector<16x32xf32> to vector<16x32xbf16>
    %18 = vector.extract_strided_slice %4 {offsets = [0, 256], sizes = [16, 32], strides = [1, 1]} : vector<16x384xf32> to vector<16x32xf32>
    %19 = arith.truncf %18 : vector<16x32xf32> to vector<16x32xbf16>
    %cst_10 = arith.constant dense<0.000000e+00> : vector<16x16xf32>
    %20 = tpu.matmul %15, %17, %cst_10 {dimension_numbers = #tpu.dot_dimension_numbers<[1], [1], [0], [0], [0, 0, 1, 0], [], []>} : vector<16x32xbf16>, vector<16x32xbf16>, vector<16x16xf32> -> vector<16x16xf32>
    %21 = arith.addf %20, %13 : vector<16x16xf32>
    %cst_11 = arith.constant dense<0xFF800000> : vector<16xf32>
    %22 = vector.multi_reduction <maximumf>, %21, %cst_11 [1] : vector<16x16xf32> to vector<16xf32>
    %23 = vector.shape_cast %22 : vector<16xf32> to vector<16x1xf32>
    %24 = vector.broadcast %23 : vector<16x1xf32> to vector<16x16xf32>
    %25 = arith.subf %21, %24 : vector<16x16xf32>
    %26 = math.exp %25 : vector<16x16xf32>
    %cst_12 = arith.constant dense<0.000000e+00> : vector<16xf32>
    %27 = vector.multi_reduction <add>, %26, %cst_12 [1] : vector<16x16xf32> to vector<16xf32>
    %28 = vector.shape_cast %27 : vector<16xf32> to vector<16x1xf32>
    %29 = tpu.reciprocal %28 {approx = true} : vector<16x1xf32> -> vector<16x1xf32>
    %30 = vector.broadcast %29 : vector<16x1xf32> to vector<16x16xf32>
    %31 = arith.mulf %26, %30 : vector<16x16xf32>
    %32 = arith.truncf %31 : vector<16x16xf32> to vector<16x16xbf16>
    %cst_13 = arith.constant dense<0.000000e+00> : vector<16x32xf32>
    %33 = tpu.matmul %32, %19, %cst_13 {dimension_numbers = #tpu.dot_dimension_numbers<[1], [0], [0], [1], [0, 0, 1, 1], [], []>} : vector<16x16xbf16>, vector<16x32xbf16>, vector<16x32xf32> -> vector<16x32xf32>
    %34 = arith.truncf %33 : vector<16x32xf32> to vector<16x32xbf16>
    %c0_14 = arith.constant 0 : index
    %c0_15 = arith.constant 0 : index
    %35 = vector.load %arg15[%c0_14, %c0_15] : memref<16x128xbf16, #tpu.memory_space<vmem>>, vector<16x32xbf16>
    tpu.vector_store %arg15[%c0_14, %c0_15], %34 {strides = array<i32>} : memref<16x128xbf16, #tpu.memory_space<vmem>>, vector<16x32xbf16>,
    %36 = vector.extract_strided_slice %4 {offsets = [0, 32], sizes = [16, 32], strides = [1, 1]} : vector<16x384xf32> to vector<16x32xf32>
    %37 = arith.truncf %36 : vector<16x32xf32> to vector<16x32xbf16>
    %38 = vector.extract_strided_slice %4 {offsets = [0, 160], sizes = [16, 32], strides = [1, 1]} : vector<16x384xf32> to vector<16x32xf32>
    %39 = arith.truncf %38 : vector<16x32xf32> to vector<16x32xbf16>
    %40 = vector.extract_strided_slice %4 {offsets = [0, 288], sizes = [16, 32], strides = [1, 1]} : vector<16x384xf32> to vector<16x32xf32>
    %41 = arith.truncf %40 : vector<16x32xf32> to vector<16x32xbf16>
    %cst_16 = arith.constant dense<0.000000e+00> : vector<16x16xf32>
    %42 = tpu.matmul %37, %39, %cst_16 {dimension_numbers = #tpu.dot_dimension_numbers<[1], [1], [0], [0], [0, 0, 1, 0], [], []>} : vector<16x32xbf16>, vector<16x32xbf16>, vector<16x16xf32> -> vector<16x16xf32>
    %43 = arith.addf %42, %13 : vector<16x16xf32>
    %cst_17 = arith.constant dense<0xFF800000> : vector<16xf32>
    %44 = vector.multi_reduction <maximumf>, %43, %cst_17 [1] : vector<16x16xf32> to vector<16xf32>
    %45 = vector.shape_cast %44 : vector<16xf32> to vector<16x1xf32>
    %46 = vector.broadcast %45 : vector<16x1xf32> to vector<16x16xf32>
    %47 = arith.subf %43, %46 : vector<16x16xf32>
    %48 = math.exp %47 : vector<16x16xf32>
    %cst_18 = arith.constant dense<0.000000e+00> : vector<16xf32>
    %49 = vector.multi_reduction <add>, %48, %cst_18 [1] : vector<16x16xf32> to vector<16xf32>
    %50 = vector.shape_cast %49 : vector<16xf32> to vector<16x1xf32>
    %51 = tpu.reciprocal %50 {approx = true} : vector<16x1xf32> -> vector<16x1xf32>
    %52 = vector.broadcast %51 : vector<16x1xf32> to vector<16x16xf32>
    %53 = arith.mulf %48, %52 : vector<16x16xf32>
    %54 = arith.truncf %53 : vector<16x16xf32> to vector<16x16xbf16>
    %cst_19 = arith.constant dense<0.000000e+00> : vector<16x32xf32>
    %55 = tpu.matmul %54, %41, %cst_19 {dimension_numbers = #tpu.dot_dimension_numbers<[1], [0], [0], [1], [0, 0, 1, 1], [], []>} : vector<16x16xbf16>, vector<16x32xbf16>, vector<16x32xf32> -> vector<16x32xf32>
    %56 = arith.truncf %55 : vector<16x32xf32> to vector<16x32xbf16>
    %c0_20 = arith.constant 0 : index
    %c32 = arith.constant 32 : index
    %57 = vector.load %arg15[%c0_20, %c32] : memref<16x128xbf16, #tpu.memory_space<vmem>>, vector<16x32xbf16>
    tpu.vector_store %arg15[%c0_20, %c32], %56 {strides = array<i32>} : memref<16x128xbf16, #tpu.memory_space<vmem>>, vector<16x32xbf16>,
    %58 = vector.extract_strided_slice %4 {offsets = [0, 64], sizes = [16, 32], strides = [1, 1]} : vector<16x384xf32> to vector<16x32xf32>
    %59 = arith.truncf %58 : vector<16x32xf32> to vector<16x32xbf16>
    %60 = vector.extract_strided_slice %4 {offsets = [0, 192], sizes = [16, 32], strides = [1, 1]} : vector<16x384xf32> to vector<16x32xf32>
    %61 = arith.truncf %60 : vector<16x32xf32> to vector<16x32xbf16>
    %62 = vector.extract_strided_slice %4 {offsets = [0, 320], sizes = [16, 32], strides = [1, 1]} : vector<16x384xf32> to vector<16x32xf32>
    %63 = arith.truncf %62 : vector<16x32xf32> to vector<16x32xbf16>
    %cst_21 = arith.constant dense<0.000000e+00> : vector<16x16xf32>
    %64 = tpu.matmul %59, %61, %cst_21 {dimension_numbers = #tpu.dot_dimension_numbers<[1], [1], [0], [0], [0, 0, 1, 0], [], []>} : vector<16x32xbf16>, vector<16x32xbf16>, vector<16x16xf32> -> vector<16x16xf32>
    %65 = arith.addf %64, %13 : vector<16x16xf32>
    %cst_22 = arith.constant dense<0xFF800000> : vector<16xf32>
    %66 = vector.multi_reduction <maximumf>, %65, %cst_22 [1] : vector<16x16xf32> to vector<16xf32>
    %67 = vector.shape_cast %66 : vector<16xf32> to vector<16x1xf32>
    %68 = vector.broadcast %67 : vector<16x1xf32> to vector<16x16xf32>
    %69 = arith.subf %65, %68 : vector<16x16xf32>
    %70 = math.exp %69 : vector<16x16xf32>
    %cst_23 = arith.constant dense<0.000000e+00> : vector<16xf32>
    %71 = vector.multi_reduction <add>, %70, %cst_23 [1] : vector<16x16xf32> to vector<16xf32>
    %72 = vector.shape_cast %71 : vector<16xf32> to vector<16x1xf32>
    %73 = tpu.reciprocal %72 {approx = true} : vector<16x1xf32> -> vector<16x1xf32>
    %74 = vector.broadcast %73 : vector<16x1xf32> to vector<16x16xf32>
    %75 = arith.mulf %70, %74 : vector<16x16xf32>
    %76 = arith.truncf %75 : vector<16x16xf32> to vector<16x16xbf16>
    %cst_24 = arith.constant dense<0.000000e+00> : vector<16x32xf32>
    %77 = tpu.matmul %76, %63, %cst_24 {dimension_numbers = #tpu.dot_dimension_numbers<[1], [0], [0], [1], [0, 0, 1, 1], [], []>} : vector<16x16xbf16>, vector<16x32xbf16>, vector<16x32xf32> -> vector<16x32xf32>
    %78 = arith.truncf %77 : vector<16x32xf32> to vector<16x32xbf16>
    %c0_25 = arith.constant 0 : index
    %c64 = arith.constant 64 : index
    %79 = vector.load %arg15[%c0_25, %c64] : memref<16x128xbf16, #tpu.memory_space<vmem>>, vector<16x32xbf16>
    tpu.vector_store %arg15[%c0_25, %c64], %78 {strides = array<i32>} : memref<16x128xbf16, #tpu.memory_space<vmem>>, vector<16x32xbf16>,
    %80 = vector.extract_strided_slice %4 {offsets = [0, 96], sizes = [16, 32], strides = [1, 1]} : vector<16x384xf32> to vector<16x32xf32>
    %81 = arith.truncf %80 : vector<16x32xf32> to vector<16x32xbf16>
    %82 = vector.extract_strided_slice %4 {offsets = [0, 224], sizes = [16, 32], strides = [1, 1]} : vector<16x384xf32> to vector<16x32xf32>
    %83 = arith.truncf %82 : vector<16x32xf32> to vector<16x32xbf16>
    %84 = vector.extract_strided_slice %4 {offsets = [0, 352], sizes = [16, 32], strides = [1, 1]} : vector<16x384xf32> to vector<16x32xf32>
    %85 = arith.truncf %84 : vector<16x32xf32> to vector<16x32xbf16>
    %cst_26 = arith.constant dense<0.000000e+00> : vector<16x16xf32>
    %86 = tpu.matmul %81, %83, %cst_26 {dimension_numbers = #tpu.dot_dimension_numbers<[1], [1], [0], [0], [0, 0, 1, 0], [], []>} : vector<16x32xbf16>, vector<16x32xbf16>, vector<16x16xf32> -> vector<16x16xf32>
    %87 = arith.addf %86, %13 : vector<16x16xf32>
    %cst_27 = arith.constant dense<0xFF800000> : vector<16xf32>
    %88 = vector.multi_reduction <maximumf>, %87, %cst_27 [1] : vector<16x16xf32> to vector<16xf32>
    %89 = vector.shape_cast %88 : vector<16xf32> to vector<16x1xf32>
    %90 = vector.broadcast %89 : vector<16x1xf32> to vector<16x16xf32>
    %91 = arith.subf %87, %90 : vector<16x16xf32>
    %92 = math.exp %91 : vector<16x16xf32>
    %cst_28 = arith.constant dense<0.000000e+00> : vector<16xf32>
    %93 = vector.multi_reduction <add>, %92, %cst_28 [1] : vector<16x16xf32> to vector<16xf32>
    %94 = vector.shape_cast %93 : vector<16xf32> to vector<16x1xf32>
    %95 = tpu.reciprocal %94 {approx = true} : vector<16x1xf32> -> vector<16x1xf32>
    %96 = vector.broadcast %95 : vector<16x1xf32> to vector<16x16xf32>
    %97 = arith.mulf %92, %96 : vector<16x16xf32>
    %98 = arith.truncf %97 : vector<16x16xf32> to vector<16x16xbf16>
    %cst_29 = arith.constant dense<0.000000e+00> : vector<16x32xf32>
    %99 = tpu.matmul %98, %85, %cst_29 {dimension_numbers = #tpu.dot_dimension_numbers<[1], [0], [0], [1], [0, 0, 1, 1], [], []>} : vector<16x16xbf16>, vector<16x32xbf16>, vector<16x32xf32> -> vector<16x32xf32>
    %100 = arith.truncf %99 : vector<16x32xf32> to vector<16x32xbf16>
    %c0_30 = arith.constant 0 : index
    %c96 = arith.constant 96 : index
    %101 = vector.load %arg15[%c0_30, %c96] : memref<16x128xbf16, #tpu.memory_space<vmem>>, vector<16x32xbf16>
    tpu.vector_store %arg15[%c0_30, %c96], %100 {strides = array<i32>} : memref<16x128xbf16, #tpu.memory_space<vmem>>, vector<16x32xbf16>,
    %c0_31 = arith.constant 0 : index
    %c0_32 = arith.constant 0 : index
    %102 = vector.load %arg15[%c0_31, %c0_32] : memref<16x128xbf16, #tpu.memory_space<vmem>>, vector<16x128xbf16>
    %c0_33 = arith.constant 0 : index
    %c0_34 = arith.constant 0 : index
    %103 = vector.load %arg4[%c0_33, %c0_34] : memref<128x128xbf16, #tpu.memory_space<vmem>>, vector<128x128xbf16>
    %cst_35 = arith.constant dense<0.000000e+00> : vector<16x128xf32>
    %104 = tpu.matmul %102, %103, %cst_35 {dimension_numbers = #tpu.dot_dimension_numbers<[1], [0], [0], [1], [0, 0, 1, 1], [], []>} : vector<16x128xbf16>, vector<128x128xbf16>, vector<16x128xf32> -> vector<16x128xf32>
    %c0_36 = arith.constant 0 : index
    %c0_37 = arith.constant 0 : index
    %105 = vector.load %arg5[%c0_36, %c0_37] : memref<1x128xf32, #tpu.memory_space<vmem>>, vector<1x128xf32>
    %106 = vector.shape_cast %105 : vector<1x128xf32> to vector<128xf32>
    %107 = vector.shape_cast %106 : vector<128xf32> to vector<1x128xf32>
    %108 = vector.broadcast %107 : vector<1x128xf32> to vector<16x128xf32>
    %109 = arith.addf %104, %108 : vector<16x128xf32>
    %110 = arith.addf %1, %109 : vector<16x128xf32>
    %c0_38 = arith.constant 0 : index
    %c0_39 = arith.constant 0 : index
    %111 = vector.load %arg6[%c0_38, %c0_39] : memref<1x128xf32, #tpu.memory_space<vmem>>, vector<1x128xf32>
    %112 = vector.shape_cast %111 : vector<1x128xf32> to vector<128xf32>
    %c0_40 = arith.constant 0 : index
    %c0_41 = arith.constant 0 : index
    %113 = vector.load %arg7[%c0_40, %c0_41] : memref<1x128xf32, #tpu.memory_space<vmem>>, vector<1x128xf32>
    %114 = vector.shape_cast %113 : vector<1x128xf32> to vector<128xf32>
    %cst_42 = arith.constant dense<0.000000e+00> : vector<16xf32>
    %115 = vector.multi_reduction <add>, %110, %cst_42 [1] : vector<16x128xf32> to vector<16xf32>
    %116 = vector.shape_cast %115 : vector<16xf32> to vector<16x1xf32>
    %cst_43 = arith.constant 1.280000e+02 : f32
    %117 = vector.broadcast %cst_43 : f32 to vector<16x1xf32>
    %118 = arith.divf %116, %117 : vector<16x1xf32>
    %119 = vector.broadcast %118 : vector<16x1xf32> to vector<16x128xf32>
    %120 = arith.subf %110, %119 : vector<16x128xf32>
    %121 = arith.mulf %120, %120 : vector<16x128xf32>
    %cst_44 = arith.constant dense<0.000000e+00> : vector<16xf32>
    %122 = vector.multi_reduction <add>, %121, %cst_44 [1] : vector<16x128xf32> to vector<16xf32>
    %123 = vector.shape_cast %122 : vector<16xf32> to vector<16x1xf32>
    %cst_45 = arith.constant 1.280000e+02 : f32
    %124 = vector.broadcast %cst_45 : f32 to vector<16x1xf32>
    %125 = arith.divf %123, %124 : vector<16x1xf32>
    %126 = vector.broadcast %118 : vector<16x1xf32> to vector<16x128xf32>
    %127 = arith.subf %110, %126 : vector<16x128xf32>
    %cst_46 = arith.constant 9.99999997E-7 : f32
    %128 = vector.broadcast %cst_46 : f32 to vector<16x1xf32>
    %129 = arith.addf %125, %128 : vector<16x1xf32>
    %130 = math.rsqrt %129 : vector<16x1xf32>
    %131 = vector.broadcast %130 : vector<16x1xf32> to vector<16x128xf32>
    %132 = arith.mulf %127, %131 : vector<16x128xf32>
    %133 = vector.shape_cast %112 : vector<128xf32> to vector<1x128xf32>
    %134 = vector.broadcast %133 : vector<1x128xf32> to vector<16x128xf32>
    %135 = arith.mulf %132, %134 : vector<16x128xf32>
    %136 = vector.shape_cast %114 : vector<128xf32> to vector<1x128xf32>
    %137 = vector.broadcast %136 : vector<1x128xf32> to vector<16x128xf32>
    %138 = arith.addf %135, %137 : vector<16x128xf32>
    %139 = arith.truncf %138 : vector<16x128xf32> to vector<16x128xbf16>
    %c0_47 = arith.constant 0 : index
    %c0_48 = arith.constant 0 : index
    %140 = vector.load %arg8[%c0_47, %c0_48] : memref<128x256xbf16, #tpu.memory_space<vmem>>, vector<128x256xbf16>
    %cst_49 = arith.constant dense<0.000000e+00> : vector<16x256xf32>
    %141 = tpu.matmul %139, %140, %cst_49 {dimension_numbers = #tpu.dot_dimension_numbers<[1], [0], [0], [1], [0, 0, 1, 1], [], []>} : vector<16x128xbf16>, vector<128x256xbf16>, vector<16x256xf32> -> vector<16x256xf32>
    %c0_50 = arith.constant 0 : index
    %c0_51 = arith.constant 0 : index
    %142 = vector.load %arg9[%c0_50, %c0_51] : memref<1x256xf32, #tpu.memory_space<vmem>>, vector<1x256xf32>
    %143 = vector.shape_cast %142 : vector<1x256xf32> to vector<256xf32>
    %144 = vector.shape_cast %143 : vector<256xf32> to vector<1x256xf32>
    %145 = vector.broadcast %144 : vector<1x256xf32> to vector<16x256xf32>
    %146 = arith.addf %141, %145 : vector<16x256xf32>
    %cst_52 = arith.constant 0.000000e+00 : f32
    %147 = vector.broadcast %cst_52 : f32 to vector<16x256xf32>
    %148 = arith.maximumf %146, %147 : vector<16x256xf32>
    %149 = arith.truncf %148 : vector<16x256xf32> to vector<16x256xbf16>
    %c0_53 = arith.constant 0 : index
    %c0_54 = arith.constant 0 : index
    %150 = vector.load %arg10[%c0_53, %c0_54] : memref<256x128xbf16, #tpu.memory_space<vmem>>, vector<256x128xbf16>
    %cst_55 = arith.constant dense<0.000000e+00> : vector<16x128xf32>
    %151 = tpu.matmul %149, %150, %cst_55 {dimension_numbers = #tpu.dot_dimension_numbers<[1], [0], [0], [1], [0, 0, 1, 1], [], []>} : vector<16x256xbf16>, vector<256x128xbf16>, vector<16x128xf32> -> vector<16x128xf32>
    %c0_56 = arith.constant 0 : index
    %c0_57 = arith.constant 0 : index
    %152 = vector.load %arg11[%c0_56, %c0_57] : memref<1x128xf32, #tpu.memory_space<vmem>>, vector<1x128xf32>
    %153 = vector.shape_cast %152 : vector<1x128xf32> to vector<128xf32>
    %154 = vector.shape_cast %153 : vector<128xf32> to vector<1x128xf32>
    %155 = vector.broadcast %154 : vector<1x128xf32> to vector<16x128xf32>
    %156 = arith.addf %151, %155 : vector<16x128xf32>
    %157 = arith.addf %138, %156 : vector<16x128xf32>
    %c0_58 = arith.constant 0 : index
    %c0_59 = arith.constant 0 : index
    %158 = vector.load %arg12[%c0_58, %c0_59] : memref<1x128xf32, #tpu.memory_space<vmem>>, vector<1x128xf32>
    %159 = vector.shape_cast %158 : vector<1x128xf32> to vector<128xf32>
    %c0_60 = arith.constant 0 : index
    %c0_61 = arith.constant 0 : index
    %160 = vector.load %arg13[%c0_60, %c0_61] : memref<1x128xf32, #tpu.memory_space<vmem>>, vector<1x128xf32>
    %161 = vector.shape_cast %160 : vector<1x128xf32> to vector<128xf32>
    %cst_62 = arith.constant dense<0.000000e+00> : vector<16xf32>
    %162 = vector.multi_reduction <add>, %157, %cst_62 [1] : vector<16x128xf32> to vector<16xf32>
    %163 = vector.shape_cast %162 : vector<16xf32> to vector<16x1xf32>
    %cst_63 = arith.constant 1.280000e+02 : f32
    %164 = vector.broadcast %cst_63 : f32 to vector<16x1xf32>
    %165 = arith.divf %163, %164 : vector<16x1xf32>
    %166 = vector.broadcast %165 : vector<16x1xf32> to vector<16x128xf32>
    %167 = arith.subf %157, %166 : vector<16x128xf32>
    %168 = arith.mulf %167, %167 : vector<16x128xf32>
    %cst_64 = arith.constant dense<0.000000e+00> : vector<16xf32>
    %169 = vector.multi_reduction <add>, %168, %cst_64 [1] : vector<16x128xf32> to vector<16xf32>
    %170 = vector.shape_cast %169 : vector<16xf32> to vector<16x1xf32>
    %cst_65 = arith.constant 1.280000e+02 : f32
    %171 = vector.broadcast %cst_65 : f32 to vector<16x1xf32>
    %172 = arith.divf %170, %171 : vector<16x1xf32>
    %173 = vector.broadcast %165 : vector<16x1xf32> to vector<16x128xf32>
    %174 = arith.subf %157, %173 : vector<16x128xf32>
    %cst_66 = arith.constant 9.99999997E-7 : f32
    %175 = vector.broadcast %cst_66 : f32 to vector<16x1xf32>
    %176 = arith.addf %172, %175 : vector<16x1xf32>
    %177 = math.rsqrt %176 : vector<16x1xf32>
    %178 = vector.broadcast %177 : vector<16x1xf32> to vector<16x128xf32>
    %179 = arith.mulf %174, %178 : vector<16x128xf32>
    %180 = vector.shape_cast %159 : vector<128xf32> to vector<1x128xf32>
    %181 = vector.broadcast %180 : vector<1x128xf32> to vector<16x128xf32>
    %182 = arith.mulf %179, %181 : vector<16x128xf32>
    %183 = vector.shape_cast %161 : vector<128xf32> to vector<1x128xf32>
    %184 = vector.broadcast %183 : vector<1x128xf32> to vector<16x128xf32>
    %185 = arith.addf %182, %184 : vector<16x128xf32>
    %c0_67 = arith.constant 0 : index
    %c0_68 = arith.constant 0 : index
    %c0_69 = arith.constant 0 : index
    %186 = vector.load %arg14[%c0_67, %c0_68, %c0_69] : memref<1x16x128xf32, #tpu.memory_space<vmem>>, vector<1x16x128xf32>
    %187 = vector.shape_cast %186 : vector<1x16x128xf32> to vector<16x128xf32>
    %188 = vector.shape_cast %185 : vector<16x128xf32> to vector<1x16x128xf32>
    tpu.vector_store %arg14[%c0_67, %c0_68, %c0_69], %188 {strides = array<i32>} : memref<1x16x128xf32, #tpu.memory_space<vmem>>, vector<1x16x128xf32>,
    return
  }
  func.func @transform_0(%arg0: i32) -> (i32, i32, i32) {
    %c0_i32 = arith.constant 0 : i32
    %c0_i32_0 = arith.constant 0 : i32
    %c0_i32_1 = arith.constant 0 : i32
    return %arg0, %c0_i32, %c0_i32_0 : i32, i32, i32
  }
  func.func @transform_1(%arg0: i32) -> (i32, i32, i32) {
    %c0_i32 = arith.constant 0 : i32
    %c0_i32_0 = arith.constant 0 : i32
    %c0_i32_1 = arith.constant 0 : i32
    return %arg0, %c0_i32, %c0_i32_0 : i32, i32, i32
  }
  func.func @transform_2(%arg0: i32) -> (i32, i32) {
    %c0_i32 = arith.constant 0 : i32
    %c0_i32_0 = arith.constant 0 : i32
    %c0_i32_1 = arith.constant 0 : i32
    return %c0_i32, %c0_i32_0 : i32, i32
  }
  func.func @transform_3(%arg0: i32) -> (i32, i32) {
    %c0_i32 = arith.constant 0 : i32
    %c0_i32_0 = arith.constant 0 : i32
    %c0_i32_1 = arith.constant 0 : i32
    return %c0_i32, %c0_i32_0 : i32, i32
  }
  func.func @transform_4(%arg0: i32) -> (i32, i32) {
    %c0_i32 = arith.constant 0 : i32
    %c0_i32_0 = arith.constant 0 : i32
    %c0_i32_1 = arith.constant 0 : i32
    return %c0_i32, %c0_i32_0 : i32, i32
  }
  func.func @transform_5(%arg0: i32) -> (i32, i32) {
    %c0_i32 = arith.constant 0 : i32
    %c0_i32_0 = arith.constant 0 : i32
    %c0_i32_1 = arith.constant 0 : i32
    return %c0_i32, %c0_i32_0 : i32, i32
  }
  func.func @transform_6(%arg0: i32) -> (i32, i32) {
    %c0_i32 = arith.constant 0 : i32
    %c0_i32_0 = arith.constant 0 : i32
    %c0_i32_1 = arith.constant 0 : i32
    return %c0_i32, %c0_i32_0 : i32, i32
  }
  func.func @transform_7(%arg0: i32) -> (i32, i32) {
    %c0_i32 = arith.constant 0 : i32
    %c0_i32_0 = arith.constant 0 : i32
    %c0_i32_1 = arith.constant 0 : i32
    return %c0_i32, %c0_i32_0 : i32, i32
  }
  func.func @transform_8(%arg0: i32) -> (i32, i32) {
    %c0_i32 = arith.constant 0 : i32
    %c0_i32_0 = arith.constant 0 : i32
    %c0_i32_1 = arith.constant 0 : i32
    return %c0_i32, %c0_i32_0 : i32, i32
  }
  func.func @transform_9(%arg0: i32) -> (i32, i32) {
    %c0_i32 = arith.constant 0 : i32
    %c0_i32_0 = arith.constant 0 : i32
    %c0_i32_1 = arith.constant 0 : i32
    return %c0_i32, %c0_i32_0 : i32, i32
  }
  func.func @transform_10(%arg0: i32) -> (i32, i32) {
    %c0_i32 = arith.constant 0 : i32
    %c0_i32_0 = arith.constant 0 : i32
    %c0_i32_1 = arith.constant 0 : i32
    return %c0_i32, %c0_i32_0 : i32, i32
  }
  func.func @transform_11(%arg0: i32) -> (i32, i32) {
    %c0_i32 = arith.constant 0 : i32
    %c0_i32_0 = arith.constant 0 : i32
    %c0_i32_1 = arith.constant 0 : i32
    return %c0_i32, %c0_i32_0 : i32, i32
  }
  func.func @transform_12(%arg0: i32) -> (i32, i32) {
    %c0_i32 = arith.constant 0 : i32
    %c0_i32_0 = arith.constant 0 : i32
    %c0_i32_1 = arith.constant 0 : i32
    return %c0_i32, %c0_i32_0 : i32, i32
  }
  func.func @transform_13(%arg0: i32) -> (i32, i32, i32) {
    %c0_i32 = arith.constant 0 : i32
    %c0_i32_0 = arith.constant 0 : i32
    %c0_i32_1 = arith.constant 0 : i32
    return %arg0, %c0_i32, %c0_i32_0 : i32, i32, i32
  }
}

</mosaic_0001>

<llo_original>
// kernel: tpu_custom_call.1
$region0: #{tpu_custom_call.1}
  #allocation0 [shape = 'u32[]', space=smem, size = 0x4, offset = 0x4, fixed_abs, tag = 'smem constant byte address 0x4 - core index']
  #allocation1 [shape = 'u32[144,128]{1,0:T(1,128)}', space=vmem, size = 0x12000, scoped, tag = 'internal scratch']
  #allocation2 [shape = 'bf16[16,128]{1,0:T(8,128)(2,1)}', space=vmem, size = 0x1000, scoped, tag = 'scratch operand']
  %s0 = inlined_call_operand.hbm [shape: f32[2,16,128], index: 0, kind: input, shape index: {}]
  %s1 = inlined_call_operand.hbm [shape: f32[2,1,16], index: 1, kind: input, shape index: {}]
  %s2 = inlined_call_operand.hbm [shape: bf16[128,384], index: 2, kind: input, shape index: {}]
  %s3 = inlined_call_operand.hbm [shape: bf16[128,128], index: 3, kind: input, shape index: {}]
  %s4 = inlined_call_operand.vmem [shape: f32[1,128], index: 4, kind: input, shape index: {}]
  %s5 = inlined_call_operand.vmem [shape: f32[1,128], index: 5, kind: input, shape index: {}]
  %s6 = inlined_call_operand.vmem [shape: f32[1,128], index: 6, kind: input, shape index: {}]
  %s7 = inlined_call_operand.hbm [shape: bf16[128,256], index: 7, kind: input, shape index: {}]
  %s8 = inlined_call_operand.vmem [shape: f32[1,256], index: 8, kind: input, shape index: {}]
  %s9 = inlined_call_operand.hbm [shape: bf16[256,128], index: 9, kind: input, shape index: {}]
  %s10 = inlined_call_operand.vmem [shape: f32[1,128], index: 10, kind: input, shape index: {}]
  %s11 = inlined_call_operand.vmem [shape: f32[1,128], index: 11, kind: input, shape index: {}]
  %s12 = inlined_call_operand.vmem [shape: f32[1,128], index: 12, kind: input, shape index: {}]
  %s13 = inlined_call_operand.hbm [shape: f32[2,16,128], index: 13, kind: output, shape index: {}]
  %s14 = sld [smem:[#allocation0]]
  $region109: #{tpu_custom_call.1} parent=0
    _
  %s16 = ssub.s32 1, %s14
  %s17 = scalar_select 0, %s16, %s14
  $region1: #{tpu_custom_call.1} parent=0
    #allocation3 [shape = 'u8[16384]{0}', space=vmem, size = 0x4000, scoped, tag = 'input window, operand 0']
    #allocation4 [shape = 's32[2]{0}', space=sflag, size = 0x8, scoped, tag = 'scoped memory for tpu_custom_call.1']
    #allocation5 [shape = 's32[2]{0}', space=sflag, size = 0x8, scoped, tag = 'scoped memory for tpu_custom_call.1']
    #allocation6 [shape = 'u8[1024]{0}', space=vmem, size = 0x400, scoped, tag = 'input window, operand 1']
    #allocation7 [shape = 's32[2]{0}', space=sflag, size = 0x8, scoped, tag = 'scoped memory for tpu_custom_call.1']
    #allocation8 [shape = 'u8[98304]{0}', space=vmem, size = 0x18000, scoped, tag = 'input window, operand 2, single buffered']
    #allocation9 [shape = 'u8[32768]{0}', space=vmem, size = 0x8000, scoped, tag = 'input window, operand 3, single buffered']
    #allocation10 [shape = 's32[1]{0}', space=sflag, size = 0x4, scoped, tag = 'scoped memory for tpu_custom_call.1']
    #allocation11 [shape = 'u8[65536]{0}', space=vmem, size = 0x10000, scoped, tag = 'input window, operand 7, single buffered']
    #allocation12 [shape = 'u8[65536]{0}', space=vmem, size = 0x10000, scoped, tag = 'input window, operand 9, single buffered']
    #allocation13 [shape = 's32[1]{0}', space=sflag, size = 0x4, scoped, tag = 'scoped memory for tpu_custom_call.1']
    #allocation14 [shape = 'u8[16384]{0}', space=vmem, size = 0x4000, scoped, tag = 'output window, operand 0']
    %18 = vsyncpa [#allocation4], 0
    %s19 = scalar_lea.sflag [#allocation4], 1
    %20 = vsyncpa %s19, 0
    %21 = vsyncpa [#allocation7], 0
    %s22 = scalar_lea.sflag [#allocation7], 1
    %23 = vsyncpa %s22, 0
    %24 = vsyncpa [#allocation10], 0
    %25 = vsyncpa [#allocation13], 0
    %26 = vsyncpa [#allocation5], 0
    %s27 = scalar_lea.sflag [#allocation5], 1
    %28 = vsyncpa %s27, 0
    loop: start=0, step=1, limit=4
    $region2: #{tpu_custom_call.1} parent=1 // loop_pre_header
      _
    $region3: #{tpu_custom_call.1} parent=1 // loop_header
      %s30 = sphi 0, %s34
      %p31 = scmp.ge.s32.totalorder %s30, 4
      %s40 = sphi 0, %s42
      %s43 = sphi 0, %s40
      %s44 = sphi 0, %s43
      %s60 = sphi 0, %s44
      %s66 = sphi 0, %s68
      %s69 = sphi 0, %s66
      %s70 = sphi 0, %s69
      %s86 = sphi 0, %s70
      %s90 = sphi 0, %s90
      %s92 = sphi 0, %s90
      %s93 = sphi 0, %s92
      %s107 = sphi 0, %s93
      %s111 = sphi 0, %s111
      %s113 = sphi 0, %s111
      %s114 = sphi 0, %s113
      %s128 = sphi 0, %s114
      %s132 = sphi 0, %s132
      %s134 = sphi 0, %s132
      %s135 = sphi 0, %s134
      %s149 = sphi 0, %s135
      %s153 = sphi 0, %s153
      %s155 = sphi 0, %s153
      %s156 = sphi 0, %s155
      %s170 = sphi 0, %s156
      %s174 = sphi 0, %s174
      %s176 = sphi 0, %s174
      %s177 = sphi 0, %s176
      %s191 = sphi 0, %s177
      %s195 = sphi 0, %s195
      %s197 = sphi 0, %s195
      %s198 = sphi 0, %s197
      %s212 = sphi 0, %s198
      %s216 = sphi 0, %s216
      %s218 = sphi 0, %s216
      %s219 = sphi 0, %s218
      %s233 = sphi 0, %s219
      %s237 = sphi 0, %s237
      %s239 = sphi 0, %s237
      %s240 = sphi 0, %s239
      %s254 = sphi 0, %s240
      %s258 = sphi 0, %s258
      %s260 = sphi 0, %s258
      %s261 = sphi 0, %s260
      %s275 = sphi 0, %s261
      %s279 = sphi 0, %s279
      %s281 = sphi 0, %s279
      %s282 = sphi 0, %s281
      %s296 = sphi 0, %s282
      %s300 = sphi 0, %s300
      %s302 = sphi 0, %s300
      %s303 = sphi 0, %s302
      %s317 = sphi 0, %s303
      %s323 = sphi 0, %s325
      %s326 = sphi 0, %s323
      %s327 = sphi 0, %s326
      %s343 = sphi 0, %s327
    $region4: #{tpu_custom_call.1} parent=1 // loop_header_branch
      %33 = sbr.rel (%p31) target = $region8
    $region5: #{tpu_custom_call.1} parent=1 // loop_body
      %s35 = ssub.s32 %s30, 1
      %s36 = ssub.s32 %s30, 2
      %s37 = sadd.s32 %s30, 1
      %s38 = ssub.s32 %s30, %s37
      %p39 = scmp.eq.s32.totalorder %s38, 0
      %s41 = sadd.s32 %s40, 1
      %s42 = scalar_select %p39, %s40, %s41
      %p45 = pneg %p39
      %p46 = scmp.eq.s32.totalorder %s30, 1
      %p47 = por %p45, %p46
      %p48 = scmp.ne.s32.totalorder %s40, %s43
      %p49 = scmp.eq.s32.totalorder %s30, 0
      %p50 = por %p48, %p49
      %p51 = scmp.ne.s32.totalorder %s40, %s43
      %p52 = scmp.eq.s32.totalorder %s35, 1
      %p53 = por %p51, %p52
      %p54 = scmp.ne.s32.totalorder %s43, %s44
      %p55 = scmp.eq.s32.totalorder %s35, 0
      %p56 = por %p54, %p55
      %p57 = scmp.ne.s32.totalorder %s43, %s44
      %p58 = scmp.eq.s32.totalorder %s36, 1
      %p59 = por %p57, %p58
      %p61 = scmp.ne.s32.totalorder %s44, %s60
      %p62 = scmp.eq.s32.totalorder %s36, 0
      %p63 = por %p61, %p62
      %s64 = ssub.s32 %s30, %s37
      %p65 = scmp.eq.s32.totalorder %s64, 0
      %s67 = sadd.s32 %s66, 1
      %s68 = scalar_select %p65, %s66, %s67
      %p71 = pneg %p65
      %p72 = scmp.eq.s32.totalorder %s30, 1
      %p73 = por %p71, %p72
      %p74 = scmp.ne.s32.totalorder %s66, %s69
      %p75 = scmp.eq.s32.totalorder %s30, 0
      %p76 = por %p74, %p75
      %p77 = scmp.ne.s32.totalorder %s66, %s69
      %p78 = scmp.eq.s32.totalorder %s35, 1
      %p79 = por %p77, %p78
      %p80 = scmp.ne.s32.totalorder %s69, %s70
      %p81 = scmp.eq.s32.totalorder %s35, 0
      %p82 = por %p80, %p81
      %p83 = scmp.ne.s32.totalorder %s69, %s70
      %p84 = scmp.eq.s32.totalorder %s36, 1
      %p85 = por %p83, %p84
      %p87 = scmp.ne.s32.totalorder %s70, %s86
      %p88 = scmp.eq.s32.totalorder %s36, 0
      %p89 = por %p87, %p88
      %s91 = sadd.s32 %s90, 1
      %p94 = scmp.eq.s32.totalorder %s30, 1
      %p95 = scmp.ne.s32.totalorder %s90, %s92
      %p96 = scmp.eq.s32.totalorder %s30, 0
      %p97 = por %p95, %p96
      %p98 = scmp.ne.s32.totalorder %s90, %s92
      %p99 = scmp.eq.s32.totalorder %s35, 1
      %p100 = por %p98, %p99
      %p101 = scmp.ne.s32.totalorder %s92, %s93
      %p102 = scmp.eq.s32.totalorder %s35, 0
      %p103 = por %p101, %p102
      %p104 = scmp.ne.s32.totalorder %s92, %s93
      %p105 = scmp.eq.s32.totalorder %s36, 1
      %p106 = por %p104, %p105
      %p108 = scmp.ne.s32.totalorder %s93, %s107
      %p109 = scmp.eq.s32.totalorder %s36, 0
      %p110 = por %p108, %p109
      %s112 = sadd.s32 %s111, 1
      %p115 = scmp.eq.s32.totalorder %s30, 1
      %p116 = scmp.ne.s32.totalorder %s111, %s113
      %p117 = scmp.eq.s32.totalorder %s30, 0
      %p118 = por %p116, %p117
      %p119 = scmp.ne.s32.totalorder %s111, %s113
      %p120 = scmp.eq.s32.totalorder %s35, 1
      %p121 = por %p119, %p120
      %p122 = scmp.ne.s32.totalorder %s113, %s114
      %p123 = scmp.eq.s32.totalorder %s35, 0
      %p124 = por %p122, %p123
      %p125 = scmp.ne.s32.totalorder %s113, %s114
      %p126 = scmp.eq.s32.totalorder %s36, 1
      %p127 = por %p125, %p126
      %p129 = scmp.ne.s32.totalorder %s114, %s128
      %p130 = scmp.eq.s32.totalorder %s36, 0
      %p131 = por %p129, %p130
      %s133 = sadd.s32 %s132, 1
      %p136 = scmp.eq.s32.totalorder %s30, 1
      %p137 = scmp.ne.s32.totalorder %s132, %s134
      %p138 = scmp.eq.s32.totalorder %s30, 0
      %p139 = por %p137, %p138
      %p140 = scmp.ne.s32.totalorder %s132, %s134
      %p141 = scmp.eq.s32.totalorder %s35, 1
      %p142 = por %p140, %p141
      %p143 = scmp.ne.s32.totalorder %s134, %s135
      %p144 = scmp.eq.s32.totalorder %s35, 0
      %p145 = por %p143, %p144
      %p146 = scmp.ne.s32.totalorder %s134, %s135
      %p147 = scmp.eq.s32.totalorder %s36, 1
      %p148 = por %p146, %p147
      %p150 = scmp.ne.s32.totalorder %s135, %s149
      %p151 = scmp.eq.s32.totalorder %s36, 0
      %p152 = por %p150, %p151
      %s154 = sadd.s32 %s153, 1
      %p157 = scmp.eq.s32.totalorder %s30, 1
      %p158 = scmp.ne.s32.totalorder %s153, %s155
      %p159 = scmp.eq.s32.totalorder %s30, 0
      %p160 = por %p158, %p159
      %p161 = scmp.ne.s32.totalorder %s153, %s155
      %p162 = scmp.eq.s32.totalorder %s35, 1
      %p163 = por %p161, %p162
      %p164 = scmp.ne.s32.totalorder %s155, %s156
      %p165 = scmp.eq.s32.totalorder %s35, 0
      %p166 = por %p164, %p165
      %p167 = scmp.ne.s32.totalorder %s155, %s156
      %p168 = scmp.eq.s32.totalorder %s36, 1
      %p169 = por %p167, %p168
      %p171 = scmp.ne.s32.totalorder %s156, %s170
      %p172 = scmp.eq.s32.totalorder %s36, 0
      %p173 = por %p171, %p172
      %s175 = sadd.s32 %s174, 1
      %p178 = scmp.eq.s32.totalorder %s30, 1
      %p179 = scmp.ne.s32.totalorder %s174, %s176
      %p180 = scmp.eq.s32.totalorder %s30, 0
      %p181 = por %p179, %p180
      %p182 = scmp.ne.s32.totalorder %s174, %s176
      %p183 = scmp.eq.s32.totalorder %s35, 1
      %p184 = por %p182, %p183
      %p185 = scmp.ne.s32.totalorder %s176, %s177
      %p186 = scmp.eq.s32.totalorder %s35, 0
      %p187 = por %p185, %p186
      %p188 = scmp.ne.s32.totalorder %s176, %s177
      %p189 = scmp.eq.s32.totalorder %s36, 1
      %p190 = por %p188, %p189
      %p192 = scmp.ne.s32.totalorder %s177, %s191
      %p193 = scmp.eq.s32.totalorder %s36, 0
      %p194 = por %p192, %p193
      %s196 = sadd.s32 %s195, 1
      %p199 = scmp.eq.s32.totalorder %s30, 1
      %p200 = scmp.ne.s32.totalorder %s195, %s197
      %p201 = scmp.eq.s32.totalorder %s30, 0
      %p202 = por %p200, %p201
      %p203 = scmp.ne.s32.totalorder %s195, %s197
      %p204 = scmp.eq.s32.totalorder %s35, 1
      %p205 = por %p203, %p204
      %p206 = scmp.ne.s32.totalorder %s197, %s198
      %p207 = scmp.eq.s32.totalorder %s35, 0
      %p208 = por %p206, %p207
      %p209 = scmp.ne.s32.totalorder %s197, %s198
      %p210 = scmp.eq.s32.totalorder %s36, 1
      %p211 = por %p209, %p210
      %p213 = scmp.ne.s32.totalorder %s198, %s212
      %p214 = scmp.eq.s32.totalorder %s36, 0
      %p215 = por %p213, %p214
      %s217 = sadd.s32 %s216, 1
      %p220 = scmp.eq.s32.totalorder %s30, 1
      %p221 = scmp.ne.s32.totalorder %s216, %s218
      %p222 = scmp.eq.s32.totalorder %s30, 0
      %p223 = por %p221, %p222
      %p224 = scmp.ne.s32.totalorder %s216, %s218
      %p225 = scmp.eq.s32.totalorder %s35, 1
      %p226 = por %p224, %p225
      %p227 = scmp.ne.s32.totalorder %s218, %s219
      %p228 = scmp.eq.s32.totalorder %s35, 0
      %p229 = por %p227, %p228
      %p230 = scmp.ne.s32.totalorder %s218, %s219
      %p231 = scmp.eq.s32.totalorder %s36, 1
      %p232 = por %p230, %p231
      %p234 = scmp.ne.s32.totalorder %s219, %s233
      %p235 = scmp.eq.s32.totalorder %s36, 0
      %p236 = por %p234, %p235
      %s238 = sadd.s32 %s237, 1
      %p241 = scmp.eq.s32.totalorder %s30, 1
      %p242 = scmp.ne.s32.totalorder %s237, %s239
      %p243 = scmp.eq.s32.totalorder %s30, 0
      %p244 = por %p242, %p243
      %p245 = scmp.ne.s32.totalorder %s237, %s239
      %p246 = scmp.eq.s32.totalorder %s35, 1
      %p247 = por %p245, %p246
      %p248 = scmp.ne.s32.totalorder %s239, %s240
      %p249 = scmp.eq.s32.totalorder %s35, 0
      %p250 = por %p248, %p249
      %p251 = scmp.ne.s32.totalorder %s239, %s240
      %p252 = scmp.eq.s32.totalorder %s36, 1
      %p253 = por %p251, %p252
      %p255 = scmp.ne.s32.totalorder %s240, %s254
      %p256 = scmp.eq.s32.totalorder %s36, 0
      %p257 = por %p255, %p256
      %s259 = sadd.s32 %s258, 1
      %p262 = scmp.eq.s32.totalorder %s30, 1
      %p263 = scmp.ne.s32.totalorder %s258, %s260
      %p264 = scmp.eq.s32.totalorder %s30, 0
      %p265 = por %p263, %p264
      %p266 = scmp.ne.s32.totalorder %s258, %s260
      %p267 = scmp.eq.s32.totalorder %s35, 1
      %p268 = por %p266, %p267
      %p269 = scmp.ne.s32.totalorder %s260, %s261
      %p270 = scmp.eq.s32.totalorder %s35, 0
      %p271 = por %p269, %p270
      %p272 = scmp.ne.s32.totalorder %s260, %s261
      %p273 = scmp.eq.s32.totalorder %s36, 1
      %p274 = por %p272, %p273
      %p276 = scmp.ne.s32.totalorder %s261, %s275
      %p277 = scmp.eq.s32.totalorder %s36, 0
      %p278 = por %p276, %p277
      %s280 = sadd.s32 %s279, 1
      %p283 = scmp.eq.s32.totalorder %s30, 1
      %p284 = scmp.ne.s32.totalorder %s279, %s281
      %p285 = scmp.eq.s32.totalorder %s30, 0
      %p286 = por %p284, %p285
      %p287 = scmp.ne.s32.totalorder %s279, %s281
      %p288 = scmp.eq.s32.totalorder %s35, 1
      %p289 = por %p287, %p288
      %p290 = scmp.ne.s32.totalorder %s281, %s282
      %p291 = scmp.eq.s32.totalorder %s35, 0
      %p292 = por %p290, %p291
      %p293 = scmp.ne.s32.totalorder %s281, %s282
      %p294 = scmp.eq.s32.totalorder %s36, 1
      %p295 = por %p293, %p294
      %p297 = scmp.ne.s32.totalorder %s282, %s296
      %p298 = scmp.eq.s32.totalorder %s36, 0
      %p299 = por %p297, %p298
      %s301 = sadd.s32 %s300, 1
      %p304 = scmp.eq.s32.totalorder %s30, 1
      %p305 = scmp.ne.s32.totalorder %s300, %s302
      %p306 = scmp.eq.s32.totalorder %s30, 0
      %p307 = por %p305, %p306
      %p308 = scmp.ne.s32.totalorder %s300, %s302
      %p309 = scmp.eq.s32.totalorder %s35, 1
      %p310 = por %p308, %p309
      %p311 = scmp.ne.s32.totalorder %s302, %s303
      %p312 = scmp.eq.s32.totalorder %s35, 0
      %p313 = por %p311, %p312
      %p314 = scmp.ne.s32.totalorder %s302, %s303
      %p315 = scmp.eq.s32.totalorder %s36, 1
      %p316 = por %p314, %p315
      %p318 = scmp.ne.s32.totalorder %s303, %s317
      %p319 = scmp.eq.s32.totalorder %s36, 0
      %p320 = por %p318, %p319
      %s321 = ssub.s32 %s30, %s37
      %p322 = scmp.eq.s32.totalorder %s321, 0
      %s324 = sadd.s32 %s323, 1
      %s325 = scalar_select %p322, %s323, %s324
      %p328 = pneg %p322
      %p329 = scmp.eq.s32.totalorder %s30, 1
      %p330 = por %p328, %p329
      %p331 = scmp.ne.s32.totalorder %s323, %s326
      %p332 = scmp.eq.s32.totalorder %s30, 0
      %p333 = por %p331, %p332
      %p334 = scmp.ne.s32.totalorder %s323, %s326
      %p335 = scmp.eq.s32.totalorder %s35, 1
      %p336 = por %p334, %p335
      %p337 = scmp.ne.s32.totalorder %s326, %s327
      %p338 = scmp.eq.s32.totalorder %s35, 0
      %p339 = por %p337, %p338
      %p340 = scmp.ne.s32.totalorder %s326, %s327
      %p341 = scmp.eq.s32.totalorder %s36, 1
      %p342 = por %p340, %p341
      %p344 = scmp.ne.s32.totalorder %s327, %s343
      %p345 = scmp.eq.s32.totalorder %s36, 0
      %p346 = por %p344, %p345
      %p347 = scmp.le.s32.totalorder 1, %s30
      %p348 = scmp.lt.s32.totalorder %s30, 3
      %p349 = pnand %p347, %p348
      %p350 = pneg %p349
      // Predicated region
      $region9: #{tpu_custom_call.1} parent=5 // pred_check
        _
      $region10: #{tpu_custom_call.1} parent=5 // pred_check_branch
        %352 = sbr.rel (%p349) target = $region12
      $region11: #{tpu_custom_call.1} parent=5 // pred_region
        %s353 = ssub.s32 %s30, 1
        // Predicated region
        $region13: #{tpu_custom_call.1} parent=11 // pred_check
          %p354 = pneg %p103
        $region14: #{tpu_custom_call.1} parent=11 // pred_check_branch
          %356 = sbr.rel (%p354) target = $region16
        $region15: #{tpu_custom_call.1} parent=11 // pred_region
          %s358 = ssub.s32 3072, 3072
          %359 = vsyncadd [#allocation7], %s358
          %s360 = sshll.u32 [#allocation8], 4
          %s361 = int_to_ptr.vmem [resolvable:$true] %s360
          %366 = dma.hbm_to_vmem [thread:$0]  %s2, 3072, %s361, [#allocation7], 192, 192, 12
        $region16: #{tpu_custom_call.1} parent=11 // pred_fallthru
          _
        // Predicated region
        $region17: #{tpu_custom_call.1} parent=11 // pred_check
          %p367 = pneg %p124
        $region18: #{tpu_custom_call.1} parent=11 // pred_check_branch
          %369 = sbr.rel (%p367) target = $region20
        $region19: #{tpu_custom_call.1} parent=11 // pred_region
          %s371 = ssub.s32 1024, 1024
          %372 = vsyncadd [#allocation10], %s371
          %s373 = sshll.u32 [#allocation9], 4
          %s374 = int_to_ptr.vmem [resolvable:$true] %s373
          %379 = dma.hbm_to_vmem [thread:$0]  %s3, 1024, %s374, [#allocation10], 64, 64, 4
        $region20: #{tpu_custom_call.1} parent=11 // pred_fallthru
          _
        // Predicated region
        $region21: #{tpu_custom_call.1} parent=11 // pred_check
          %p380 = pneg %p145
        $region22: #{tpu_custom_call.1} parent=11 // pred_check_branch
          %382 = sbr.rel (%p380) target = $region24
        $region23: #{tpu_custom_call.1} parent=11 // pred_region
          _
        $region24: #{tpu_custom_call.1} parent=11 // pred_fallthru
          _
        // Predicated region
        $region25: #{tpu_custom_call.1} parent=11 // pred_check
          %p383 = pneg %p166
        $region26: #{tpu_custom_call.1} parent=11 // pred_check_branch
          %385 = sbr.rel (%p383) target = $region28
        $region27: #{tpu_custom_call.1} parent=11 // pred_region
          _
        $region28: #{tpu_custom_call.1} parent=11 // pred_fallthru
          _
        // Predicated region
        $region29: #{tpu_custom_call.1} parent=11 // pred_check
          %p386 = pneg %p187
        $region30: #{tpu_custom_call.1} parent=11 // pred_check_branch
          %388 = sbr.rel (%p386) target = $region32
        $region31: #{tpu_custom_call.1} parent=11 // pred_region
          _
        $region32: #{tpu_custom_call.1} parent=11 // pred_fallthru
          _
        // Predicated region
        $region33: #{tpu_custom_call.1} parent=11 // pred_check
          %p389 = pneg %p208
        $region34: #{tpu_custom_call.1} parent=11 // pred_check_branch
          %391 = sbr.rel (%p389) target = $region36
        $region35: #{tpu_custom_call.1} parent=11 // pred_region
          %s393 = ssub.s32 2048, 2048
          %394 = vsyncadd [#allocation10], %s393
          %s395 = sshll.u32 [#allocation11], 4
          %s396 = int_to_ptr.vmem [resolvable:$true] %s395
          %401 = dma.hbm_to_vmem [thread:$0]  %s7, 2048, %s396, [#allocation10], 128, 128, 8
        $region36: #{tpu_custom_call.1} parent=11 // pred_fallthru
          _
        // Predicated region
        $region37: #{tpu_custom_call.1} parent=11 // pred_check
          %p402 = pneg %p229
        $region38: #{tpu_custom_call.1} parent=11 // pred_check_branch
          %404 = sbr.rel (%p402) target = $region40
        $region39: #{tpu_custom_call.1} parent=11 // pred_region
          _
        $region40: #{tpu_custom_call.1} parent=11 // pred_fallthru
          _
        // Predicated region
        $region41: #{tpu_custom_call.1} parent=11 // pred_check
          %p405 = pneg %p250
        $region42: #{tpu_custom_call.1} parent=11 // pred_check_branch
          %407 = sbr.rel (%p405) target = $region44
        $region43: #{tpu_custom_call.1} parent=11 // pred_region
          %s409 = ssub.s32 2048, 2048
          %410 = vsyncadd [#allocation13], %s409
          %s411 = sshll.u32 [#allocation12], 4
          %s412 = int_to_ptr.vmem [resolvable:$true] %s411
          %417 = dma.hbm_to_vmem [thread:$0]  %s9, 2048, %s412, [#allocation13], 64, 64, 4
        $region44: #{tpu_custom_call.1} parent=11 // pred_fallthru
          _
        // Predicated region
        $region45: #{tpu_custom_call.1} parent=11 // pred_check
          %p418 = pneg %p271
        $region46: #{tpu_custom_call.1} parent=11 // pred_check_branch
          %420 = sbr.rel (%p418) target = $region48
        $region47: #{tpu_custom_call.1} parent=11 // pred_region
          _
        $region48: #{tpu_custom_call.1} parent=11 // pred_fallthru
          _
        // Predicated region
        $region49: #{tpu_custom_call.1} parent=11 // pred_check
          %p421 = pneg %p292
        $region50: #{tpu_custom_call.1} parent=11 // pred_check_branch
          %423 = sbr.rel (%p421) target = $region52
        $region51: #{tpu_custom_call.1} parent=11 // pred_region
          _
        $region52: #{tpu_custom_call.1} parent=11 // pred_fallthru
          _
        // Predicated region
        $region53: #{tpu_custom_call.1} parent=11 // pred_check
          %p424 = pneg %p313
        $region54: #{tpu_custom_call.1} parent=11 // pred_check_branch
          %426 = sbr.rel (%p424) target = $region56
        $region55: #{tpu_custom_call.1} parent=11 // pred_region
          _
        $region56: #{tpu_custom_call.1} parent=11 // pred_fallthru
          _
      $region12: #{tpu_custom_call.1} parent=5 // pred_fallthru
        _
      %p427 = scmp.lt.s32.totalorder %s30, 2
      // Predicated region
      $region57: #{tpu_custom_call.1} parent=5 // pred_check
        %p428 = pneg %p427
      $region58: #{tpu_custom_call.1} parent=5 // pred_check_branch
        %430 = sbr.rel (%p428) target = $region60
      $region59: #{tpu_custom_call.1} parent=5 // pred_region
        // Predicated region
        $region61: #{tpu_custom_call.1} parent=59 // pred_check
          %p431 = pneg %p50
        $region62: #{tpu_custom_call.1} parent=59 // pred_check_branch
          %433 = sbr.rel (%p431) target = $region64
        $region63: #{tpu_custom_call.1} parent=59 // pred_region
          %s434 = sand.u32 %s40, 1
          %s435 = scalar_lea.sflag [#allocation4], %s434
          %s436 = sand.u32 %s40, 1
          %s437 = smul.addr %s436, 16
          %s438 = scalar_lea.vmem [#allocation3], %s437
          %s440 = ssub.s32 256, 256
          %441 = vsyncadd %s435, %s440
          %s442 = smul.addr %s30, 2
          %s443 = smul.addr %s442, 128
          %s444 = scalar_lea.hbm %s0, %s443
          %s445 = sshll.u32 %s438, 4
          %s446 = int_to_ptr.vmem [resolvable:$true] %s445
          %451 = dma.hbm_to_vmem [thread:$0]  %s444, 256, %s446, %s435, 128, 128, 8
        $region64: #{tpu_custom_call.1} parent=59 // pred_fallthru
          _
        // Predicated region
        $region65: #{tpu_custom_call.1} parent=59 // pred_check
          %p452 = pneg %p76
        $region66: #{tpu_custom_call.1} parent=59 // pred_check_branch
          %454 = sbr.rel (%p452) target = $region68
        $region67: #{tpu_custom_call.1} parent=59 // pred_region
          %s455 = sand.u32 %s30, 1
          %s456 = scalar_lea.sflag [#allocation7], %s455
          %s457 = sand.u32 %s66, 1
          %s458 = scalar_lea.vmem [#allocation6], %s457
          %s460 = ssub.s32 16, 16
          %461 = vsyncadd %s456, %s460
          %s462 = smul.addr %s30, 16
          %s463 = scalar_lea.hbm %s1, %s462
          %s465 = sshll.u32 %s458, 4
          %s466 = int_to_ptr.vmem [resolvable:$true] %s465
          %468 = dma.hbm_to_vmem [thread:$0]  %s463, 16, %s466, %s456
        $region68: #{tpu_custom_call.1} parent=59 // pred_fallthru
          _
      $region60: #{tpu_custom_call.1} parent=5 // pred_fallthru
        _
      %p469 = scmp.le.s32.totalorder 1, %s30
      %p470 = scmp.lt.s32.totalorder %s30, 3
      %p471 = pnand %p469, %p470
      %p472 = pneg %p471
      // Predicated region
      $region69: #{tpu_custom_call.1} parent=5 // pred_check
        _
      $region70: #{tpu_custom_call.1} parent=5 // pred_check_branch
        %474 = sbr.rel (%p471) target = $region72
      $region71: #{tpu_custom_call.1} parent=5 // pred_region
        %s475 = ssub.s32 %s30, 1
        %s476 = sand.u32 %s43, 1
        %s477 = scalar_lea.sflag [#allocation4], %s476
        %s478 = sand.u32 %s43, 1
        %s479 = smul.addr %s478, 16
        %s480 = scalar_lea.vmem [#allocation3], %s479
        // Predicated region
        $region73: #{tpu_custom_call.1} parent=71 // pred_check
          %p481 = pneg %p56
        $region74: #{tpu_custom_call.1} parent=71 // pred_check_branch
          %483 = sbr.rel (%p481) target = $region76
        $region75: #{tpu_custom_call.1} parent=71 // pred_region
          %484 = dma.done %s477, 256
        $region76: #{tpu_custom_call.1} parent=71 // pred_fallthru
          _
        %s485 = sand.u32 %s35, 1
        %s486 = scalar_lea.sflag [#allocation7], %s485
        %s487 = sand.u32 %s69, 1
        %s488 = scalar_lea.vmem [#allocation6], %s487
        // Predicated region
        $region77: #{tpu_custom_call.1} parent=71 // pred_check
          %p489 = pneg %p82
        $region78: #{tpu_custom_call.1} parent=71 // pred_check_branch
          %491 = sbr.rel (%p489) target = $region80
        $region79: #{tpu_custom_call.1} parent=71 // pred_region
          %492 = dma.done %s486, 16
        $region80: #{tpu_custom_call.1} parent=71 // pred_fallthru
          _
        // Predicated region
        $region81: #{tpu_custom_call.1} parent=71 // pred_check
          %p493 = pneg %p103
        $region82: #{tpu_custom_call.1} parent=71 // pred_check_branch
          %495 = sbr.rel (%p493) target = $region84
        $region83: #{tpu_custom_call.1} parent=71 // pred_region
          %496 = dma.done [#allocation7], 3072
        $region84: #{tpu_custom_call.1} parent=71 // pred_fallthru
          _
        // Predicated region
        $region85: #{tpu_custom_call.1} parent=71 // pred_check
          %p497 = pneg %p124
        $region86: #{tpu_custom_call.1} parent=71 // pred_check_branch
          %499 = sbr.rel (%p497) target = $region88
        $region87: #{tpu_custom_call.1} parent=71 // pred_region
          %500 = dma.done [#allocation10], 1024
        $region88: #{tpu_custom_call.1} parent=71 // pred_fallthru
          _
        // Predicated region
        $region89: #{tpu_custom_call.1} parent=71 // pred_check
          %p501 = pneg %p208
        $region90: #{tpu_custom_call.1} parent=71 // pred_check_branch
          %503 = sbr.rel (%p501) target = $region92
        $region91: #{tpu_custom_call.1} parent=71 // pred_region
          %504 = dma.done [#allocation10], 2048
        $region92: #{tpu_custom_call.1} parent=71 // pred_fallthru
          _
        // Predicated region
        $region93: #{tpu_custom_call.1} parent=71 // pred_check
          %p505 = pneg %p250
        $region94: #{tpu_custom_call.1} parent=71 // pred_check_branch
          %507 = sbr.rel (%p505) target = $region96
        $region95: #{tpu_custom_call.1} parent=71 // pred_region
          %508 = dma.done [#allocation13], 2048
        $region96: #{tpu_custom_call.1} parent=71 // pred_fallthru
          _
        %s509 = sand.u32 %s43, 1
        %s510 = scalar_lea.sflag [#allocation4], %s509
        %s511 = sand.u32 %s43, 1
        %s512 = smul.addr %s511, 16
        %s513 = scalar_lea.vmem [#allocation3], %s512
        %p514 = pneg %p56
        %p515 = pneg %p53
        %s516 = sand.u32 %s35, 1
        %s517 = scalar_lea.sflag [#allocation7], %s516
        %s518 = sand.u32 %s69, 1
        %s519 = scalar_lea.vmem [#allocation6], %s518
        %p520 = pneg %p82
        %p521 = pneg %p79
        %p522 = pneg %p103
        %p523 = pneg %p100
        %p524 = pneg %p124
        %p525 = pneg %p121
        %p526 = pneg %p145
        %p527 = pneg %p142
        %p528 = pneg %p166
        %p529 = pneg %p163
        %p530 = pneg %p187
        %p531 = pneg %p184
        %p532 = pneg %p208
        %p533 = pneg %p205
        %p534 = pneg %p229
        %p535 = pneg %p226
        %p536 = pneg %p250
        %p537 = pneg %p247
        %p538 = pneg %p271
        %p539 = pneg %p268
        %p540 = pneg %p292
        %p541 = pneg %p289
        %p542 = pneg %p313
        %p543 = pneg %p310
        %p544 = pneg %p339
        %p545 = pneg %p336
        %s546 = sand.u32 %s326, 1
        %s547 = scalar_lea.sflag [#allocation5], %s546
        %s548 = sand.u32 %s326, 1
        %s549 = smul.addr %s548, 16
        %s550 = scalar_lea.vmem [#allocation14], %s549
        %v552 = vld [vmem:[%s480] sm:$0xff]
        %v553 = vld [vmem:[%s480 + $0x8] sm:$0xff]
        %v554 = vpack.c.bf16 %v553, %v552
        %v555 = vld [vmem:[#allocation8] sm:$0xff]
        %v556 = vld [vmem:[#allocation8 + $0x8] sm:$0xf]
        %v557 = vld [vmem:[#allocation8 + $0xc] sm:$0xff]
        %v558 = vld [vmem:[#allocation8 + $0x14] sm:$0xf]
        %v559 = vld [vmem:[#allocation8 + $0x18] sm:$0xff]
        %v560 = vld [vmem:[#allocation8 + $0x20] sm:$0xf]
        %v561 = vld [vmem:[#allocation8 + $0x24] sm:$0xff]
        %v562 = vld [vmem:[#allocation8 + $0x2c] sm:$0xf]
        %v563 = vld [vmem:[#allocation8 + $0x30] sm:$0xff]
        %v564 = vld [vmem:[#allocation8 + $0x38] sm:$0xf]
        %v565 = vld [vmem:[#allocation8 + $0x3c] sm:$0xff]
        %v566 = vld [vmem:[#allocation8 + $0x44] sm:$0xf]
        %v567 = vld [vmem:[#allocation8 + $0x48] sm:$0xff]
        %v568 = vld [vmem:[#allocation8 + $0x50] sm:$0xf]
        %v569 = vld [vmem:[#allocation8 + $0x54] sm:$0xff]
        %v570 = vld [vmem:[#allocation8 + $0x5c] sm:$0xf]
        %v571 = vld [vmem:[#allocation8 + $0x60] sm:$0xff]
        %v572 = vld [vmem:[#allocation8 + $0x68] sm:$0xf]
        %v573 = vld [vmem:[#allocation8 + $0x6c] sm:$0xff]
        %v574 = vld [vmem:[#allocation8 + $0x74] sm:$0xf]
        %v575 = vld [vmem:[#allocation8 + $0x78] sm:$0xff]
        %v576 = vld [vmem:[#allocation8 + $0x80] sm:$0xf]
        %v577 = vld [vmem:[#allocation8 + $0x84] sm:$0xff]
        %v578 = vld [vmem:[#allocation8 + $0x8c] sm:$0xf]
        %v579 = vld [vmem:[#allocation8 + $0x90] sm:$0xff]
        %v580 = vld [vmem:[#allocation8 + $0x98] sm:$0xf]
        %v581 = vld [vmem:[#allocation8 + $0x9c] sm:$0xff]
        %v582 = vld [vmem:[#allocation8 + $0xa4] sm:$0xf]
        %v583 = vld [vmem:[#allocation8 + $0xa8] sm:$0xff]
        %v584 = vld [vmem:[#allocation8 + $0xb0] sm:$0xf]
        %v585 = vld [vmem:[#allocation8 + $0xb4] sm:$0xff]
        %v586 = vld [vmem:[#allocation8 + $0xbc] sm:$0xf]
        %v619 = vunpack.c.l.b16 %v555
        %v620 = vunpack.c.h.b16 %v555
        %v621 = vunpack.c.l.b16 %v556
        %v622 = vunpack.c.l.b16 %v557
        %v623 = vunpack.c.h.b16 %v557
        %v624 = vunpack.c.l.b16 %v558
        %v625 = vunpack.c.l.b16 %v559
        %v626 = vunpack.c.h.b16 %v559
        %v627 = vunpack.c.l.b16 %v560
        %v628 = vunpack.c.l.b16 %v561
        %v629 = vunpack.c.h.b16 %v561
        %v630 = vunpack.c.l.b16 %v562
        %v631 = vunpack.c.l.b16 %v563
        %v632 = vunpack.c.h.b16 %v563
        %v633 = vunpack.c.l.b16 %v564
        %v634 = vunpack.c.l.b16 %v565
        %v635 = vunpack.c.h.b16 %v565
        %v636 = vunpack.c.l.b16 %v566
        %v637 = vunpack.c.l.b16 %v567
        %v638 = vunpack.c.h.b16 %v567
        %v639 = vunpack.c.l.b16 %v568
        %v640 = vunpack.c.l.b16 %v569
        %v641 = vunpack.c.h.b16 %v569
        %v642 = vunpack.c.l.b16 %v570
        %v643 = vunpack.c.l.b16 %v571
        %v644 = vunpack.c.h.b16 %v571
        %v645 = vunpack.c.l.b16 %v572
        %v646 = vunpack.c.l.b16 %v573
        %v647 = vunpack.c.h.b16 %v573
        %v648 = vunpack.c.l.b16 %v574
        %v649 = vunpack.c.l.b16 %v575
        %v650 = vunpack.c.h.b16 %v575
        %v651 = vunpack.c.l.b16 %v576
        %v652 = vunpack.c.l.b16 %v577
        %v653 = vunpack.c.h.b16 %v577
        %v654 = vunpack.c.l.b16 %v578
        %v655 = vunpack.c.l.b16 %v579
        %v656 = vunpack.c.h.b16 %v579
        %v657 = vunpack.c.l.b16 %v580
        %v658 = vunpack.c.l.b16 %v581
        %v659 = vunpack.c.h.b16 %v581
        %v660 = vunpack.c.l.b16 %v582
        %v661 = vunpack.c.l.b16 %v583
        %v662 = vunpack.c.h.b16 %v583
        %v663 = vunpack.c.l.b16 %v584
        %v664 = vunpack.c.l.b16 %v585
        %v665 = vunpack.c.h.b16 %v585
        %v666 = vunpack.c.l.b16 %v586
        %v667 = vpack.c.b16 %v622, %v619
        %v668 = vpack.c.b16 %v623, %v620
        %v669 = vpack.c.b16 %v624, %v621
        %v670 = vpack.c.b16 %v628, %v625
        %v671 = vpack.c.b16 %v629, %v626
        %v672 = vpack.c.b16 %v630, %v627
        %v673 = vpack.c.b16 %v634, %v631
        %v674 = vpack.c.b16 %v635, %v632
        %v675 = vpack.c.b16 %v636, %v633
        %v676 = vpack.c.b16 %v640, %v637
        %v677 = vpack.c.b16 %v641, %v638
        %v678 = vpack.c.b16 %v642, %v639
        %v679 = vpack.c.b16 %v646, %v643
        %v680 = vpack.c.b16 %v647, %v644
        %v681 = vpack.c.b16 %v648, %v645
        %v682 = vpack.c.b16 %v652, %v649
        %v683 = vpack.c.b16 %v653, %v650
        %v684 = vpack.c.b16 %v654, %v651
        %v685 = vpack.c.b16 %v658, %v655
        %v686 = vpack.c.b16 %v659, %v656
        %v687 = vpack.c.b16 %v660, %v657
        %v688 = vpack.c.b16 %v664, %v661
        %v689 = vpack.c.b16 %v665, %v662
        %v690 = vpack.c.b16 %v666, %v663
        %715 = vmatprep.subr.bf16.mxu0 %v689
        %716 = vmatpush1.bf16.msra.mxu0 %v688
        %717 = vmatprep.subr.bf16.mxu0 %v686
        %718 = vmatpush1.bf16.msra.mxu0 %v685
        %719 = vmatprep.subr.bf16.mxu0 %v683
        %720 = vmatpush1.bf16.msra.mxu0 %v682
        %721 = vmatprep.subr.bf16.mxu0 %v680
        %722 = vmatpush1.bf16.msra.mxu0 %v679
        %723 = vmatprep.subr.bf16.mxu0 %v677
        %724 = vmatpush1.bf16.msra.mxu0 %v676
        %725 = vmatprep.subr.bf16.mxu0 %v674
        %726 = vmatpush1.bf16.msra.mxu0 %v673
        %727 = vmatprep.subr.bf16.mxu0 %v671
        %728 = vmatpush1.bf16.msra.mxu0 %v670
        %729 = vmatprep.subr.bf16.mxu0 %v668
        %730 = vmatpush1.bf16.msra.mxu0 %v667
        %731 = vmatprep.subr.bf16.mxu0 0
        %732 = vmatpush2.bf16.msra.mxu0 0
        %733 = vmatprep.subr.bf16.mxu0 0
        %734 = vmatpush2.bf16.msra.mxu0 0
        %735 = vmatprep.subr.bf16.mxu0 0
        %736 = vmatpush2.bf16.msra.mxu0 0
        %737 = vmatprep.subr.bf16.mxu0 0
        %738 = vmatpush2.bf16.msra.mxu0 0
        %739 = vmatprep.subr.bf16.mxu0 0
        %740 = vmatpush2.bf16.msra.mxu0 0
        %741 = vmatprep.subr.bf16.mxu0 0
        %742 = vmatpush2.bf16.msra.mxu0 0
        %743 = vmatprep.subr.bf16.mxu0 0
        %744 = vmatpush2.bf16.msra.mxu0 0
        %745 = vmatprep.subr.bf16.mxu0 0
        %746 = vmatpush2.bf16.msra.mxu0 0
        %747 = vmatprep.mubr.bf16.mxu0 0
        %748 = vmatmul.mubr.bf16.gmra.mxu0 %v554
        %v749 = vpop.f32.mrf.mxu0
        %v750 = vadd.f32 0.0, %v749
        %v751 = vpop.f32.mrf.mxu0
        %v752 = vadd.f32 0.0, %v751
        %v753 = vpop.f32.mrf.mxu0
        %v754 = vadd.f32 0.0, %v753
        %v755 = vpop.f32.mrf.mxu0
        %v756 = vadd.f32 0.0, %v755
        %757 = vdwg.mxu0
        %758 = vmatprep.subr.bf16.mxu0 0
        %759 = vmatpush1.bf16.msra.mxu0 %v690
        %760 = vmatprep.subr.bf16.mxu0 0
        %761 = vmatpush1.bf16.msra.mxu0 %v687
        %762 = vmatprep.subr.bf16.mxu0 0
        %763 = vmatpush1.bf16.msra.mxu0 %v684
        %764 = vmatprep.subr.bf16.mxu0 0
        %765 = vmatpush1.bf16.msra.mxu0 %v681
        %766 = vmatprep.subr.bf16.mxu0 0
        %767 = vmatpush1.bf16.msra.mxu0 %v678
        %768 = vmatprep.subr.bf16.mxu0 0
        %769 = vmatpush1.bf16.msra.mxu0 %v675
        %770 = vmatprep.subr.bf16.mxu0 0
        %771 = vmatpush1.bf16.msra.mxu0 %v672
        %772 = vmatprep.subr.bf16.mxu0 0
        %773 = vmatpush1.bf16.msra.mxu0 %v669
        %774 = vmatprep.subr.bf16.mxu0 0
        %775 = vmatpush2.bf16.msra.mxu0 0
        %776 = vmatprep.subr.bf16.mxu0 0
        %777 = vmatpush2.bf16.msra.mxu0 0
        %778 = vmatprep.subr.bf16.mxu0 0
        %779 = vmatpush2.bf16.msra.mxu0 0
        %780 = vmatprep.subr.bf16.mxu0 0
        %781 = vmatpush2.bf16.msra.mxu0 0
        %782 = vmatprep.subr.bf16.mxu0 0
        %783 = vmatpush2.bf16.msra.mxu0 0
        %784 = vmatprep.subr.bf16.mxu0 0
        %785 = vmatpush2.bf16.msra.mxu0 0
        %786 = vmatprep.subr.bf16.mxu0 0
        %787 = vmatpush2.bf16.msra.mxu0 0
        %788 = vmatprep.subr.bf16.mxu0 0
        %789 = vmatpush2.bf16.msra.mxu0 0
        %790 = vmatprep.mubr.bf16.mxu0 0
        %791 = vmatmul.mubr.bf16.gmra.mxu0 %v554
        %v792 = vpop.f32.mrf.mxu0
        %v793 = vadd.f32 0.0, %v792
        %v794 = vpop.f32.mrf.mxu0
        %v795 = vpop.f32.mrf.mxu0
        %v796 = vadd.f32 0.0, %v795
        %v797 = vpop.f32.mrf.mxu0
        %798 = vdwg.mxu0
        %v799 = vld [vmem:[%s488] sm:$0x1]
        %vm800 = vcmp.eq.f32.partialorder %v799, 0.0
        %v801 = vsel %vm800, -1e+30, 0.0
        %v803 = vlaneseq
        %v804 = vshrl.u32 %v803, 7
        %v805 = vsub.s32 0, %v804
        %v806 = vrot.slane %v801, %v805
        %v808 = vpack.c.bf16 %v754, %v750
        %v809 = vpack.c.bf16 %v756, %v752
        %v810 = vpack.c.bf16 %v796, %v793
        %vm811 = vcmask 261120
        %v813 = vsel %vm811, %v808, 0
        %v816 = vsel %vm811, %v809, 0
        %818 = vmatprep.subr.bf16.mxu0 0
        %819 = vmatpush1.bf16.xpose.msra.mxu0 0
        %820 = vmatprep.subr.bf16.mxu0 0
        %821 = vmatpush1.bf16.xpose.msra.mxu0 0
        %822 = vmatprep.subr.bf16.mxu0 0
        %823 = vmatpush1.bf16.xpose.msra.mxu0 0
        %824 = vmatprep.subr.bf16.mxu0 0
        %825 = vmatpush1.bf16.xpose.msra.mxu0 0
        %826 = vmatprep.subr.bf16.mxu0 0
        %827 = vmatpush1.bf16.xpose.msra.mxu0 0
        %828 = vmatprep.subr.bf16.mxu0 0
        %829 = vmatpush1.bf16.xpose.msra.mxu0 0
        %830 = vmatprep.subr.bf16.mxu0 0
        %831 = vmatpush1.bf16.xpose.msra.mxu0 0
        %832 = vmatprep.subr.bf16.mxu0 0
        %833 = vmatpush1.bf16.xpose.msra.mxu0 %v816
        %834 = vmatprep.subr.bf16.mxu0 0
        %835 = vmatpush2.bf16.xpose.msra.mxu0 0
        %836 = vmatprep.subr.bf16.mxu0 0
        %837 = vmatpush2.bf16.xpose.msra.mxu0 0
        %838 = vmatprep.subr.bf16.mxu0 0
        %839 = vmatpush2.bf16.xpose.msra.mxu0 0
        %840 = vmatprep.subr.bf16.mxu0 0
        %841 = vmatpush2.bf16.xpose.msra.mxu0 0
        %842 = vmatprep.subr.bf16.mxu0 0
        %843 = vmatpush2.bf16.xpose.msra.mxu0 0
        %844 = vmatprep.subr.bf16.mxu0 0
        %845 = vmatpush2.bf16.xpose.msra.mxu0 0
        %846 = vmatprep.subr.bf16.mxu0 0
        %847 = vmatpush2.bf16.xpose.msra.mxu0 0
        %848 = vmatprep.subr.bf16.mxu0 0
        %849 = vmatpush2.bf16.xpose.msra.mxu0 0
        %850 = vmatprep.mubr.bf16.mxu0 0
        %851 = vmatmul.mubr.bf16.gmra.mxu0 %v813
        %v852 = vpop.f32.mrf.mxu0
        %v853 = vadd.f32 %v806, %v852
        %v854 = vpop.f32.mrf.mxu0
        %v855 = vpop.f32.mrf.mxu0
        %v856 = vadd.f32 %v806, %v855
        %v857 = vpop.f32.mrf.mxu0
        %858 = vdwg.mxu0
        %vm859 = vcmask 130048
        %v860 = vsel %vm859, %v853, -inf
        %861 = vmax.xlane.f32.xlu0 %v860
        %v862 = vpop.xlane.xlu0 %861
        %v863 = vsel %vm859, %v856, -inf
        %864 = vmax.xlane.f32.xlu0 %v863
        %v865 = vpop.xlane.xlu0 %864
        %v866 = vsub.f32 %v853, %v862
        %v867 = vsub.f32 %v856, %v865
        %v868 = vmul.f32 %v866, 1.442695
        %v869 = vpow.pop %v868
        %v870 = vmul.f32 %v867, 1.442695
        %v871 = vpow.pop %v870
        %v872 = vsel %vm859, %v869, 0.0
        %873 = vadd.xlane.f32.xlu0 %v872
        %v874 = vpop.xlane.xlu0 %873
        %v875 = vsel %vm859, %v871, 0.0
        %876 = vadd.xlane.f32.xlu0 %v875
        %v877 = vpop.xlane.xlu0 %876
        %v878 = vrcp.pop %v874
        %v879 = vrcp.pop %v877
        %v880 = vmul.f32 %v869, %v878
        %v881 = vmul.f32 %v871, %v879
        %v882 = vpack.c.bf16 %v881, %v880
        %v884 = vsel %vm859, %v882, 0
        %886 = vmatprep.subr.bf16.mxu0 0
        %887 = vmatpush1.bf16.msra.mxu0 0
        %888 = vmatprep.subr.bf16.mxu0 0
        %889 = vmatpush1.bf16.msra.mxu0 0
        %890 = vmatprep.subr.bf16.mxu0 0
        %891 = vmatpush1.bf16.msra.mxu0 0
        %892 = vmatprep.subr.bf16.mxu0 0
        %893 = vmatpush1.bf16.msra.mxu0 0
        %894 = vmatprep.subr.bf16.mxu0 0
        %895 = vmatpush1.bf16.msra.mxu0 0
        %896 = vmatprep.subr.bf16.mxu0 0
        %897 = vmatpush1.bf16.msra.mxu0 0
        %898 = vmatprep.subr.bf16.mxu0 0
        %899 = vmatpush1.bf16.msra.mxu0 0
        %900 = vmatprep.subr.bf16.mxu0 0
        %901 = vmatpush1.bf16.msra.mxu0 %v810
        %902 = vmatprep.subr.bf16.mxu0 0
        %903 = vmatpush2.bf16.msra.mxu0 0
        %904 = vmatprep.subr.bf16.mxu0 0
        %905 = vmatpush2.bf16.msra.mxu0 0
        %906 = vmatprep.subr.bf16.mxu0 0
        %907 = vmatpush2.bf16.msra.mxu0 0
        %908 = vmatprep.subr.bf16.mxu0 0
        %909 = vmatpush2.bf16.msra.mxu0 0
        %910 = vmatprep.subr.bf16.mxu0 0
        %911 = vmatpush2.bf16.msra.mxu0 0
        %912 = vmatprep.subr.bf16.mxu0 0
        %913 = vmatpush2.bf16.msra.mxu0 0
        %914 = vmatprep.subr.bf16.mxu0 0
        %915 = vmatpush2.bf16.msra.mxu0 0
        %916 = vmatprep.subr.bf16.mxu0 0
        %917 = vmatpush2.bf16.msra.mxu0 0
        %918 = vmatprep.mubr.bf16.mxu0 0
        %919 = vmatmul.mubr.bf16.gmra.mxu0 %v884
        %v920 = vpop.f32.mrf.mxu0
        %v921 = vadd.f32 0.0, %v920
        %v922 = vpop.f32.mrf.mxu0
        %v923 = vpop.f32.mrf.mxu0
        %v924 = vadd.f32 0.0, %v923
        %v925 = vpop.f32.mrf.mxu0
        %926 = vdwg.mxu0
        %v927 = vpack.c.bf16 %v924, %v921
        %v929 = vunpack.c.l.b16 %v927
        %v930 = vunpack.c.h.b16 %v927
        %v931 = vpack.c.b16 %v929, %v929
        %v932 = vpack.c.b16 %v930, %v930
        %vm935 = vcmask 257024
        %936 = vst.msk [vmem:[#allocation2] sm:$0xf] %vm935, %v931
        %937 = vst.msk [vmem:[#allocation2 + $0x4] sm:$0xf] %vm935, %v932
        %939 = vrot.lane.b32.xlu0 %v808, 96
        %v940 = vpop.permute.xlu0 %939
        %942 = vrot.lane.b32.xlu0 %v809, 96
        %v943 = vpop.permute.xlu0 %942
        %v945 = vsel %vm811, %v940, 0
        %v948 = vsel %vm811, %v943, 0
        %950 = vmatprep.subr.bf16.mxu0 0
        %951 = vmatpush1.bf16.xpose.msra.mxu0 0
        %952 = vmatprep.subr.bf16.mxu0 0
        %953 = vmatpush1.bf16.xpose.msra.mxu0 0
        %954 = vmatprep.subr.bf16.mxu0 0
        %955 = vmatpush1.bf16.xpose.msra.mxu0 0
        %956 = vmatprep.subr.bf16.mxu0 0
        %957 = vmatpush1.bf16.xpose.msra.mxu0 0
        %958 = vmatprep.subr.bf16.mxu0 0
        %959 = vmatpush1.bf16.xpose.msra.mxu0 0
        %960 = vmatprep.subr.bf16.mxu0 0
        %961 = vmatpush1.bf16.xpose.msra.mxu0 0
        %962 = vmatprep.subr.bf16.mxu0 0
        %963 = vmatpush1.bf16.xpose.msra.mxu0 0
        %964 = vmatprep.subr.bf16.mxu0 0
        %965 = vmatpush1.bf16.xpose.msra.mxu0 %v948
        %966 = vmatprep.subr.bf16.mxu0 0
        %967 = vmatpush2.bf16.xpose.msra.mxu0 0
        %968 = vmatprep.subr.bf16.mxu0 0
        %969 = vmatpush2.bf16.xpose.msra.mxu0 0
        %970 = vmatprep.subr.bf16.mxu0 0
        %971 = vmatpush2.bf16.xpose.msra.mxu0 0
        %972 = vmatprep.subr.bf16.mxu0 0
        %973 = vmatpush2.bf16.xpose.msra.mxu0 0
        %974 = vmatprep.subr.bf16.mxu0 0
        %975 = vmatpush2.bf16.xpose.msra.mxu0 0
        %976 = vmatprep.subr.bf16.mxu0 0
        %977 = vmatpush2.bf16.xpose.msra.mxu0 0
        %978 = vmatprep.subr.bf16.mxu0 0
        %979 = vmatpush2.bf16.xpose.msra.mxu0 0
        %980 = vmatprep.subr.bf16.mxu0 0
        %981 = vmatpush2.bf16.xpose.msra.mxu0 0
        %982 = vmatprep.mubr.bf16.mxu0 0
        %983 = vmatmul.mubr.bf16.gmra.mxu0 %v945
        %v984 = vpop.f32.mrf.mxu0
        %v985 = vadd.f32 %v806, %v984
        %v986 = vpop.f32.mrf.mxu0
        %v987 = vpop.f32.mrf.mxu0
        %v988 = vadd.f32 %v806, %v987
        %v989 = vpop.f32.mrf.mxu0
        %990 = vdwg.mxu0
        %v991 = vsel %vm859, %v985, -inf
        %992 = vmax.xlane.f32.xlu0 %v991
        %v993 = vpop.xlane.xlu0 %992
        %v994 = vsel %vm859, %v988, -inf
        %995 = vmax.xlane.f32.xlu0 %v994
        %v996 = vpop.xlane.xlu0 %995
        %v997 = vsub.f32 %v985, %v993
        %v998 = vsub.f32 %v988, %v996
        %v999 = vmul.f32 %v997, 1.442695
        %v1000 = vpow.pop %v999
        %v1001 = vmul.f32 %v998, 1.442695
        %v1002 = vpow.pop %v1001
        %v1003 = vsel %vm859, %v1000, 0.0
        %1004 = vadd.xlane.f32.xlu0 %v1003
        %v1005 = vpop.xlane.xlu0 %1004
        %v1006 = vsel %vm859, %v1002, 0.0
        %1007 = vadd.xlane.f32.xlu0 %v1006
        %v1008 = vpop.xlane.xlu0 %1007
        %v1009 = vrcp.pop %v1005
        %v1010 = vrcp.pop %v1008
        %v1011 = vmul.f32 %v1000, %v1009
        %v1012 = vmul.f32 %v1002, %v1010
        %v1013 = vpack.c.bf16 %v1012, %v1011
        %1015 = vrot.lane.b32.xlu0 %v810, 96
        %v1016 = vpop.permute.xlu0 %1015
        %v1019 = vsel %vm859, %v1013, 0
        %1021 = vmatprep.subr.bf16.mxu0 0
        %1022 = vmatpush1.bf16.msra.mxu0 0
        %1023 = vmatprep.subr.bf16.mxu0 0
        %1024 = vmatpush1.bf16.msra.mxu0 0
        %1025 = vmatprep.subr.bf16.mxu0 0
        %1026 = vmatpush1.bf16.msra.mxu0 0
        %1027 = vmatprep.subr.bf16.mxu0 0
        %1028 = vmatpush1.bf16.msra.mxu0 0
        %1029 = vmatprep.subr.bf16.mxu0 0
        %1030 = vmatpush1.bf16.msra.mxu0 0
        %1031 = vmatprep.subr.bf16.mxu0 0
        %1032 = vmatpush1.bf16.msra.mxu0 0
        %1033 = vmatprep.subr.bf16.mxu0 0
        %1034 = vmatpush1.bf16.msra.mxu0 0
        %1035 = vmatprep.subr.bf16.mxu0 0
        %1036 = vmatpush1.bf16.msra.mxu0 %v1016
        %1037 = vmatprep.subr.bf16.mxu0 0
        %1038 = vmatpush2.bf16.msra.mxu0 0
        %1039 = vmatprep.subr.bf16.mxu0 0
        %1040 = vmatpush2.bf16.msra.mxu0 0
        %1041 = vmatprep.subr.bf16.mxu0 0
        %1042 = vmatpush2.bf16.msra.mxu0 0
        %1043 = vmatprep.subr.bf16.mxu0 0
        %1044 = vmatpush2.bf16.msra.mxu0 0
        %1045 = vmatprep.subr.bf16.mxu0 0
        %1046 = vmatpush2.bf16.msra.mxu0 0
        %1047 = vmatprep.subr.bf16.mxu0 0
        %1048 = vmatpush2.bf16.msra.mxu0 0
        %1049 = vmatprep.subr.bf16.mxu0 0
        %1050 = vmatpush2.bf16.msra.mxu0 0
        %1051 = vmatprep.subr.bf16.mxu0 0
        %1052 = vmatpush2.bf16.msra.mxu0 0
        %1053 = vmatprep.mubr.bf16.mxu0 0
        %1054 = vmatmul.mubr.bf16.gmra.mxu0 %v1019
        %v1055 = vpop.f32.mrf.mxu0
        %v1056 = vadd.f32 0.0, %v1055
        %v1057 = vpop.f32.mrf.mxu0
        %v1058 = vpop.f32.mrf.mxu0
        %v1059 = vadd.f32 0.0, %v1058
        %v1060 = vpop.f32.mrf.mxu0
        %1061 = vdwg.mxu0
        %v1062 = vpack.c.bf16 %v1059, %v1056
        %v1064 = vunpack.c.l.b16 %v1062
        %v1065 = vunpack.c.h.b16 %v1062
        %v1066 = vpack.c.b16 %v1064, %v1064
        %v1067 = vpack.c.b16 %v1065, %v1065
        %1068 = vrot.lane.b32.xlu0 %v1066, 32
        %v1069 = vpop.permute.xlu0 %1068
        %1070 = vrot.lane.b32.xlu0 %v1067, 32
        %v1071 = vpop.permute.xlu0 %1070
        %vm1074 = vcmask 519424
        %1075 = vst.msk [vmem:[#allocation2] sm:$0xf] %vm1074, %v1069
        %1076 = vst.msk [vmem:[#allocation2 + $0x4] sm:$0xf] %vm1074, %v1071
        %1077 = vrot.lane.b32.xlu0 %v808, 64
        %v1078 = vpop.permute.xlu0 %1077
        %1079 = vrot.lane.b32.xlu0 %v809, 64
        %v1080 = vpop.permute.xlu0 %1079
        %v1082 = vsel %vm811, %v1078, 0
        %v1085 = vsel %vm811, %v1080, 0
        %1087 = vmatprep.subr.bf16.mxu0 0
        %1088 = vmatpush1.bf16.xpose.msra.mxu0 0
        %1089 = vmatprep.subr.bf16.mxu0 0
        %1090 = vmatpush1.bf16.xpose.msra.mxu0 0
        %1091 = vmatprep.subr.bf16.mxu0 0
        %1092 = vmatpush1.bf16.xpose.msra.mxu0 0
        %1093 = vmatprep.subr.bf16.mxu0 0
        %1094 = vmatpush1.bf16.xpose.msra.mxu0 0
        %1095 = vmatprep.subr.bf16.mxu0 0
        %1096 = vmatpush1.bf16.xpose.msra.mxu0 0
        %1097 = vmatprep.subr.bf16.mxu0 0
        %1098 = vmatpush1.bf16.xpose.msra.mxu0 0
        %1099 = vmatprep.subr.bf16.mxu0 0
        %1100 = vmatpush1.bf16.xpose.msra.mxu0 0
        %1101 = vmatprep.subr.bf16.mxu0 0
        %1102 = vmatpush1.bf16.xpose.msra.mxu0 %v1085
        %1103 = vmatprep.subr.bf16.mxu0 0
        %1104 = vmatpush2.bf16.xpose.msra.mxu0 0
        %1105 = vmatprep.subr.bf16.mxu0 0
        %1106 = vmatpush2.bf16.xpose.msra.mxu0 0
        %1107 = vmatprep.subr.bf16.mxu0 0
        %1108 = vmatpush2.bf16.xpose.msra.mxu0 0
        %1109 = vmatprep.subr.bf16.mxu0 0
        %1110 = vmatpush2.bf16.xpose.msra.mxu0 0
        %1111 = vmatprep.subr.bf16.mxu0 0
        %1112 = vmatpush2.bf16.xpose.msra.mxu0 0
        %1113 = vmatprep.subr.bf16.mxu0 0
        %1114 = vmatpush2.bf16.xpose.msra.mxu0 0
        %1115 = vmatprep.subr.bf16.mxu0 0
        %1116 = vmatpush2.bf16.xpose.msra.mxu0 0
        %1117 = vmatprep.subr.bf16.mxu0 0
        %1118 = vmatpush2.bf16.xpose.msra.mxu0 0
        %1119 = vmatprep.mubr.bf16.mxu0 0
        %1120 = vmatmul.mubr.bf16.gmra.mxu0 %v1082
        %v1121 = vpop.f32.mrf.mxu0
        %v1122 = vadd.f32 %v806, %v1121
        %v1123 = vpop.f32.mrf.mxu0
        %v1124 = vpop.f32.mrf.mxu0
        %v1125 = vadd.f32 %v806, %v1124
        %v1126 = vpop.f32.mrf.mxu0
        %1127 = vdwg.mxu0
        %v1128 = vsel %vm859, %v1122, -inf
        %1129 = vmax.xlane.f32.xlu0 %v1128
        %v1130 = vpop.xlane.xlu0 %1129
        %v1131 = vsel %vm859, %v1125, -inf
        %1132 = vmax.xlane.f32.xlu0 %v1131
        %v1133 = vpop.xlane.xlu0 %1132
        %v1134 = vsub.f32 %v1122, %v1130
        %v1135 = vsub.f32 %v1125, %v1133
        %v1136 = vmul.f32 %v1134, 1.442695
        %v1137 = vpow.pop %v1136
        %v1138 = vmul.f32 %v1135, 1.442695
        %v1139 = vpow.pop %v1138
        %v1140 = vsel %vm859, %v1137, 0.0
        %1141 = vadd.xlane.f32.xlu0 %v1140
        %v1142 = vpop.xlane.xlu0 %1141
        %v1143 = vsel %vm859, %v1139, 0.0
        %1144 = vadd.xlane.f32.xlu0 %v1143
        %v1145 = vpop.xlane.xlu0 %1144
        %v1146 = vrcp.pop %v1142
        %v1147 = vrcp.pop %v1145
        %v1148 = vmul.f32 %v1137, %v1146
        %v1149 = vmul.f32 %v1139, %v1147
        %v1150 = vpack.c.bf16 %v1149, %v1148
        %1151 = vrot.lane.b32.xlu0 %v810, 64
        %v1152 = vpop.permute.xlu0 %1151
        %v1155 = vsel %vm859, %v1150, 0
        %1157 = vmatprep.subr.bf16.mxu0 0
        %1158 = vmatpush1.bf16.msra.mxu0 0
        %1159 = vmatprep.subr.bf16.mxu0 0
        %1160 = vmatpush1.bf16.msra.mxu0 0
        %1161 = vmatprep.subr.bf16.mxu0 0
        %1162 = vmatpush1.bf16.msra.mxu0 0
        %1163 = vmatprep.subr.bf16.mxu0 0
        %1164 = vmatpush1.bf16.msra.mxu0 0
        %1165 = vmatprep.subr.bf16.mxu0 0
        %1166 = vmatpush1.bf16.msra.mxu0 0
        %1167 = vmatprep.subr.bf16.mxu0 0
        %1168 = vmatpush1.bf16.msra.mxu0 0
        %1169 = vmatprep.subr.bf16.mxu0 0
        %1170 = vmatpush1.bf16.msra.mxu0 0
        %1171 = vmatprep.subr.bf16.mxu0 0
        %1172 = vmatpush1.bf16.msra.mxu0 %v1152
        %1173 = vmatprep.subr.bf16.mxu0 0
        %1174 = vmatpush2.bf16.msra.mxu0 0
        %1175 = vmatprep.subr.bf16.mxu0 0
        %1176 = vmatpush2.bf16.msra.mxu0 0
        %1177 = vmatprep.subr.bf16.mxu0 0
        %1178 = vmatpush2.bf16.msra.mxu0 0
        %1179 = vmatprep.subr.bf16.mxu0 0
        %1180 = vmatpush2.bf16.msra.mxu0 0
        %1181 = vmatprep.subr.bf16.mxu0 0
        %1182 = vmatpush2.bf16.msra.mxu0 0
        %1183 = vmatprep.subr.bf16.mxu0 0
        %1184 = vmatpush2.bf16.msra.mxu0 0
        %1185 = vmatprep.subr.bf16.mxu0 0
        %1186 = vmatpush2.bf16.msra.mxu0 0
        %1187 = vmatprep.subr.bf16.mxu0 0
        %1188 = vmatpush2.bf16.msra.mxu0 0
        %1189 = vmatprep.mubr.bf16.mxu0 0
        %1190 = vmatmul.mubr.bf16.gmra.mxu0 %v1155
        %v1191 = vpop.f32.mrf.mxu0
        %v1192 = vadd.f32 0.0, %v1191
        %v1193 = vpop.f32.mrf.mxu0
        %v1194 = vpop.f32.mrf.mxu0
        %v1195 = vadd.f32 0.0, %v1194
        %v1196 = vpop.f32.mrf.mxu0
        %1197 = vdwg.mxu0
        %v1198 = vpack.c.bf16 %v1195, %v1192
        %v1200 = vunpack.c.l.b16 %v1198
        %v1201 = vunpack.c.h.b16 %v1198
        %v1202 = vpack.c.b16 %v1200, %v1200
        %v1203 = vpack.c.b16 %v1201, %v1201
        %1204 = vrot.lane.b32.xlu0 %v1202, 64
        %v1205 = vpop.permute.xlu0 %1204
        %1206 = vrot.lane.b32.xlu0 %v1203, 64
        %v1207 = vpop.permute.xlu0 %1206
        %vm1210 = vcmask 781824
        %1211 = vst.msk [vmem:[#allocation2] sm:$0xf] %vm1210, %v1205
        %1212 = vst.msk [vmem:[#allocation2 + $0x4] sm:$0xf] %vm1210, %v1207
        %1213 = vrot.lane.b32.xlu0 %v808, 32
        %v1214 = vpop.permute.xlu0 %1213
        %1215 = vrot.lane.b32.xlu0 %v809, 32
        %v1216 = vpop.permute.xlu0 %1215
        %v1218 = vsel %vm811, %v1214, 0
        %v1221 = vsel %vm811, %v1216, 0
        %1223 = vmatprep.subr.bf16.mxu0 0
        %1224 = vmatpush1.bf16.xpose.msra.mxu0 0
        %1225 = vmatprep.subr.bf16.mxu0 0
        %1226 = vmatpush1.bf16.xpose.msra.mxu0 0
        %1227 = vmatprep.subr.bf16.mxu0 0
        %1228 = vmatpush1.bf16.xpose.msra.mxu0 0
        %1229 = vmatprep.subr.bf16.mxu0 0
        %1230 = vmatpush1.bf16.xpose.msra.mxu0 0
        %1231 = vmatprep.subr.bf16.mxu0 0
        %1232 = vmatpush1.bf16.xpose.msra.mxu0 0
        %1233 = vmatprep.subr.bf16.mxu0 0
        %1234 = vmatpush1.bf16.xpose.msra.mxu0 0
        %1235 = vmatprep.subr.bf16.mxu0 0
        %1236 = vmatpush1.bf16.xpose.msra.mxu0 0
        %1237 = vmatprep.subr.bf16.mxu0 0
        %1238 = vmatpush1.bf16.xpose.msra.mxu0 %v1221
        %1239 = vmatprep.subr.bf16.mxu0 0
        %1240 = vmatpush2.bf16.xpose.msra.mxu0 0
        %1241 = vmatprep.subr.bf16.mxu0 0
        %1242 = vmatpush2.bf16.xpose.msra.mxu0 0
        %1243 = vmatprep.subr.bf16.mxu0 0
        %1244 = vmatpush2.bf16.xpose.msra.mxu0 0
        %1245 = vmatprep.subr.bf16.mxu0 0
        %1246 = vmatpush2.bf16.xpose.msra.mxu0 0
        %1247 = vmatprep.subr.bf16.mxu0 0
        %1248 = vmatpush2.bf16.xpose.msra.mxu0 0
        %1249 = vmatprep.subr.bf16.mxu0 0
        %1250 = vmatpush2.bf16.xpose.msra.mxu0 0
        %1251 = vmatprep.subr.bf16.mxu0 0
        %1252 = vmatpush2.bf16.xpose.msra.mxu0 0
        %1253 = vmatprep.subr.bf16.mxu0 0
        %1254 = vmatpush2.bf16.xpose.msra.mxu0 0
        %1255 = vmatprep.mubr.bf16.mxu0 0
        %1256 = vmatmul.mubr.bf16.gmra.mxu0 %v1218
        %v1257 = vpop.f32.mrf.mxu0
        %v1258 = vadd.f32 %v806, %v1257
        %v1259 = vpop.f32.mrf.mxu0
        %v1260 = vpop.f32.mrf.mxu0
        %v1261 = vadd.f32 %v806, %v1260
        %v1262 = vpop.f32.mrf.mxu0
        %1263 = vdwg.mxu0
        %v1264 = vsel %vm859, %v1258, -inf
        %1265 = vmax.xlane.f32.xlu0 %v1264
        %v1266 = vpop.xlane.xlu0 %1265
        %v1267 = vsel %vm859, %v1261, -inf
        %1268 = vmax.xlane.f32.xlu0 %v1267
        %v1269 = vpop.xlane.xlu0 %1268
        %v1270 = vsub.f32 %v1258, %v1266
        %v1271 = vsub.f32 %v1261, %v1269
        %v1272 = vmul.f32 %v1270, 1.442695
        %v1273 = vpow.pop %v1272
        %v1274 = vmul.f32 %v1271, 1.442695
        %v1275 = vpow.pop %v1274
        %v1276 = vsel %vm859, %v1273, 0.0
        %1277 = vadd.xlane.f32.xlu0 %v1276
        %v1278 = vpop.xlane.xlu0 %1277
        %v1279 = vsel %vm859, %v1275, 0.0
        %1280 = vadd.xlane.f32.xlu0 %v1279
        %v1281 = vpop.xlane.xlu0 %1280
        %v1282 = vrcp.pop %v1278
        %v1283 = vrcp.pop %v1281
        %v1284 = vmul.f32 %v1273, %v1282
        %v1285 = vmul.f32 %v1275, %v1283
        %v1286 = vpack.c.bf16 %v1285, %v1284
        %1287 = vrot.lane.b32.xlu0 %v810, 32
        %v1288 = vpop.permute.xlu0 %1287
        %v1291 = vsel %vm859, %v1286, 0
        %1293 = vmatprep.subr.bf16.mxu0 0
        %1294 = vmatpush1.bf16.msra.mxu0 0
        %1295 = vmatprep.subr.bf16.mxu0 0
        %1296 = vmatpush1.bf16.msra.mxu0 0
        %1297 = vmatprep.subr.bf16.mxu0 0
        %1298 = vmatpush1.bf16.msra.mxu0 0
        %1299 = vmatprep.subr.bf16.mxu0 0
        %1300 = vmatpush1.bf16.msra.mxu0 0
        %1301 = vmatprep.subr.bf16.mxu0 0
        %1302 = vmatpush1.bf16.msra.mxu0 0
        %1303 = vmatprep.subr.bf16.mxu0 0
        %1304 = vmatpush1.bf16.msra.mxu0 0
        %1305 = vmatprep.subr.bf16.mxu0 0
        %1306 = vmatpush1.bf16.msra.mxu0 0
        %1307 = vmatprep.subr.bf16.mxu0 0
        %1308 = vmatpush1.bf16.msra.mxu0 %v1288
        %1309 = vmatprep.subr.bf16.mxu0 0
        %1310 = vmatpush2.bf16.msra.mxu0 0
        %1311 = vmatprep.subr.bf16.mxu0 0
        %1312 = vmatpush2.bf16.msra.mxu0 0
        %1313 = vmatprep.subr.bf16.mxu0 0
        %1314 = vmatpush2.bf16.msra.mxu0 0
        %1315 = vmatprep.subr.bf16.mxu0 0
        %1316 = vmatpush2.bf16.msra.mxu0 0
        %1317 = vmatprep.subr.bf16.mxu0 0
        %1318 = vmatpush2.bf16.msra.mxu0 0
        %1319 = vmatprep.subr.bf16.mxu0 0
        %1320 = vmatpush2.bf16.msra.mxu0 0
        %1321 = vmatprep.subr.bf16.mxu0 0
        %1322 = vmatpush2.bf16.msra.mxu0 0
        %1323 = vmatprep.subr.bf16.mxu0 0
        %1324 = vmatpush2.bf16.msra.mxu0 0
        %1325 = vmatprep.mubr.bf16.mxu0 0
        %1326 = vmatmul.mubr.bf16.gmra.mxu0 %v1291
        %v1327 = vpop.f32.mrf.mxu0
        %v1328 = vadd.f32 0.0, %v1327
        %v1329 = vpop.f32.mrf.mxu0
        %v1330 = vpop.f32.mrf.mxu0
        %v1331 = vadd.f32 0.0, %v1330
        %v1332 = vpop.f32.mrf.mxu0
        %1333 = vdwg.mxu0
        %v1334 = vpack.c.bf16 %v1331, %v1328
        %v1336 = vunpack.c.l.b16 %v1334
        %v1337 = vunpack.c.h.b16 %v1334
        %v1338 = vpack.c.b16 %v1336, %v1336
        %v1339 = vpack.c.b16 %v1337, %v1337
        %1340 = vrot.lane.b32.xlu0 %v1338, 96
        %v1341 = vpop.permute.xlu0 %1340
        %1342 = vrot.lane.b32.xlu0 %v1339, 96
        %v1343 = vpop.permute.xlu0 %1342
        %vm1346 = vcmask 1044224
        %1347 = vst.msk [vmem:[#allocation2] sm:$0xf] %vm1346, %v1341
        %1348 = vst.msk [vmem:[#allocation2 + $0x4] sm:$0xf] %vm1346, %v1343
        %v1349 = vld [vmem:[#allocation2] sm:$0xf]
        %v1350 = vld [vmem:[#allocation2 + $0x4] sm:$0xf]
        %v1351 = vld [vmem:[#allocation9] sm:$0xf]
        %v1352 = vld [vmem:[#allocation9 + $0x4] sm:$0xf]
        %v1353 = vld [vmem:[#allocation9 + $0x8] sm:$0xf]
        %v1354 = vld [vmem:[#allocation9 + $0xc] sm:$0xf]
        %v1355 = vld [vmem:[#allocation9 + $0x10] sm:$0xf]
        %v1356 = vld [vmem:[#allocation9 + $0x14] sm:$0xf]
        %v1357 = vld [vmem:[#allocation9 + $0x18] sm:$0xf]
        %v1358 = vld [vmem:[#allocation9 + $0x1c] sm:$0xf]
        %v1359 = vld [vmem:[#allocation9 + $0x20] sm:$0xf]
        %v1360 = vld [vmem:[#allocation9 + $0x24] sm:$0xf]
        %v1361 = vld [vmem:[#allocation9 + $0x28] sm:$0xf]
        %v1362 = vld [vmem:[#allocation9 + $0x2c] sm:$0xf]
        %v1363 = vld [vmem:[#allocation9 + $0x30] sm:$0xf]
        %v1364 = vld [vmem:[#allocation9 + $0x34] sm:$0xf]
        %v1365 = vld [vmem:[#allocation9 + $0x38] sm:$0xf]
        %v1366 = vld [vmem:[#allocation9 + $0x3c] sm:$0xf]
        %v1367 = vld [vmem:[%s4] sm:$0x1]
        %v1369 = vlaneseq
        %v1370 = vshrl.u32 %v1369, 7
        %v1371 = vsub.s32 0, %v1370
        %v1372 = vrot.slane %v1367, %v1371
        %v1376 = vunpack.c.l.b16 %v1349
        %v1377 = vunpack.c.l.b16 %v1350
        %v1378 = vpack.c.b16 %v1377, %v1376
        %v1396 = vunpack.c.l.b16 %v1351
        %v1397 = vunpack.c.l.b16 %v1352
        %v1398 = vunpack.c.l.b16 %v1353
        %v1399 = vunpack.c.l.b16 %v1354
        %v1400 = vunpack.c.l.b16 %v1355
        %v1401 = vunpack.c.l.b16 %v1356
        %v1402 = vunpack.c.l.b16 %v1357
        %v1403 = vunpack.c.l.b16 %v1358
        %v1404 = vunpack.c.l.b16 %v1359
        %v1405 = vunpack.c.l.b16 %v1360
        %v1406 = vunpack.c.l.b16 %v1361
        %v1407 = vunpack.c.l.b16 %v1362
        %v1408 = vunpack.c.l.b16 %v1363
        %v1409 = vunpack.c.l.b16 %v1364
        %v1410 = vunpack.c.l.b16 %v1365
        %v1411 = vunpack.c.l.b16 %v1366
        %v1412 = vpack.c.b16 %v1397, %v1396
        %v1413 = vpack.c.b16 %v1399, %v1398
        %v1414 = vpack.c.b16 %v1401, %v1400
        %v1415 = vpack.c.b16 %v1403, %v1402
        %v1416 = vpack.c.b16 %v1405, %v1404
        %v1417 = vpack.c.b16 %v1407, %v1406
        %v1418 = vpack.c.b16 %v1409, %v1408
        %v1419 = vpack.c.b16 %v1411, %v1410
        %1428 = vmatprep.subr.bf16.mxu0 0
        %1429 = vmatpush1.bf16.msra.mxu0 %v1419
        %1430 = vmatprep.subr.bf16.mxu0 0
        %1431 = vmatpush1.bf16.msra.mxu0 %v1418
        %1432 = vmatprep.subr.bf16.mxu0 0
        %1433 = vmatpush1.bf16.msra.mxu0 %v1417
        %1434 = vmatprep.subr.bf16.mxu0 0
        %1435 = vmatpush1.bf16.msra.mxu0 %v1416
        %1436 = vmatprep.subr.bf16.mxu0 0
        %1437 = vmatpush1.bf16.msra.mxu0 %v1415
        %1438 = vmatprep.subr.bf16.mxu0 0
        %1439 = vmatpush1.bf16.msra.mxu0 %v1414
        %1440 = vmatprep.subr.bf16.mxu0 0
        %1441 = vmatpush1.bf16.msra.mxu0 %v1413
        %1442 = vmatprep.subr.bf16.mxu0 0
        %1443 = vmatpush1.bf16.msra.mxu0 %v1412
        %1444 = vmatprep.subr.bf16.mxu0 0
        %1445 = vmatpush2.bf16.msra.mxu0 0
        %1446 = vmatprep.subr.bf16.mxu0 0
        %1447 = vmatpush2.bf16.msra.mxu0 0
        %1448 = vmatprep.subr.bf16.mxu0 0
        %1449 = vmatpush2.bf16.msra.mxu0 0
        %1450 = vmatprep.subr.bf16.mxu0 0
        %1451 = vmatpush2.bf16.msra.mxu0 0
        %1452 = vmatprep.subr.bf16.mxu0 0
        %1453 = vmatpush2.bf16.msra.mxu0 0
        %1454 = vmatprep.subr.bf16.mxu0 0
        %1455 = vmatpush2.bf16.msra.mxu0 0
        %1456 = vmatprep.subr.bf16.mxu0 0
        %1457 = vmatpush2.bf16.msra.mxu0 0
        %1458 = vmatprep.subr.bf16.mxu0 0
        %1459 = vmatpush2.bf16.msra.mxu0 0
        %1460 = vmatprep.mubr.bf16.mxu0 0
        %1461 = vmatmul.mubr.bf16.gmra.mxu0 %v1378
        %v1462 = vpop.f32.mrf.mxu0
        %v1463 = vadd.f32 %v1372, %v1462
        %v1464 = vpop.f32.mrf.mxu0
        %v1465 = vpop.f32.mrf.mxu0
        %v1466 = vadd.f32 %v1372, %v1465
        %v1467 = vpop.f32.mrf.mxu0
        %1468 = vdwg.mxu0
        %v1469 = vadd.f32 %v552, %v1463
        %v1470 = vadd.f32 %v553, %v1466
        %v1471 = vld [vmem:[%s5] sm:$0x1]
        %v1472 = vld [vmem:[%s6] sm:$0x1]
        %1473 = vadd.xlane.f32.xlu0 %v1469
        %v1474 = vpop.xlane.xlu0 %1473
        %1475 = vadd.xlane.f32.xlu0 %v1470
        %v1476 = vpop.xlane.xlu0 %1475
        %v1477 = vrcp.pop 128.0
        %v1478 = vmul.f32 %v1474, %v1477
        %v1479 = vmul.f32 %v1476, %v1477
        %v1480 = vsub.f32 %v1469, %v1478
        %v1481 = vsub.f32 %v1470, %v1479
        %v1482 = vmul.f32 %v1480, %v1480
        %v1483 = vmul.f32 %v1481, %v1481
        %1484 = vadd.xlane.f32.xlu0 %v1482
        %v1485 = vpop.xlane.xlu0 %1484
        %1486 = vadd.xlane.f32.xlu0 %v1483
        %v1487 = vpop.xlane.xlu0 %1486
        %v1488 = vmul.f32 %v1485, %v1477
        %v1489 = vmul.f32 %v1487, %v1477
        %v1490 = vadd.f32 %v1488, 1e-06
        %v1491 = vadd.f32 %v1489, 1e-06
        %v1492 = vrsqrt.pop %v1490
        %v1493 = vrsqrt.pop %v1491
        %v1494 = vmul.f32 %v1480, %v1492
        %v1495 = vmul.f32 %v1481, %v1493
        %v1497 = vlaneseq
        %v1498 = vshrl.u32 %v1497, 7
        %v1499 = vsub.s32 0, %v1498
        %v1500 = vrot.slane %v1471, %v1499
        %v1502 = vmul.f32 %v1494, %v1500
        %v1503 = vmul.f32 %v1495, %v1500
        %v1505 = vlaneseq
        %v1506 = vshrl.u32 %v1505, 7
        %v1507 = vsub.s32 0, %v1506
        %v1508 = vrot.slane %v1472, %v1507
        %v1510 = vadd.f32 %v1502, %v1508
        %v1511 = vadd.f32 %v1503, %v1508
        %v1512 = vpack.c.bf16 %v1511, %v1510
        %v1513 = vld [vmem:[#allocation11] sm:$0xff]
        %v1514 = vld [vmem:[#allocation11 + $0x8] sm:$0xff]
        %v1515 = vld [vmem:[#allocation11 + $0x10] sm:$0xff]
        %v1516 = vld [vmem:[#allocation11 + $0x18] sm:$0xff]
        %v1517 = vld [vmem:[#allocation11 + $0x20] sm:$0xff]
        %v1518 = vld [vmem:[#allocation11 + $0x28] sm:$0xff]
        %v1519 = vld [vmem:[#allocation11 + $0x30] sm:$0xff]
        %v1520 = vld [vmem:[#allocation11 + $0x38] sm:$0xff]
        %v1521 = vld [vmem:[#allocation11 + $0x40] sm:$0xff]
        %v1522 = vld [vmem:[#allocation11 + $0x48] sm:$0xff]
        %v1523 = vld [vmem:[#allocation11 + $0x50] sm:$0xff]
        %v1524 = vld [vmem:[#allocation11 + $0x58] sm:$0xff]
        %v1525 = vld [vmem:[#allocation11 + $0x60] sm:$0xff]
        %v1526 = vld [vmem:[#allocation11 + $0x68] sm:$0xff]
        %v1527 = vld [vmem:[#allocation11 + $0x70] sm:$0xff]
        %v1528 = vld [vmem:[#allocation11 + $0x78] sm:$0xff]
        %v1529 = vld [vmem:[%s8] sm:$0x3]
        %v1531 = vlaneseq
        %v1532 = vshrl.u32 %v1531, 7
        %v1533 = vsub.s32 0, %v1532
        %v1534 = vrot.slane %v1529, %v1533
        %v1535 = vlaneseq
        %v1536 = vshrl.u32 %v1535, 7
        %v1537 = vsub.s32 1, %v1536
        %v1538 = vrot.slane %v1529, %v1537
        %v1557 = vunpack.c.l.b16 %v1513
        %v1558 = vunpack.c.h.b16 %v1513
        %v1559 = vunpack.c.l.b16 %v1514
        %v1560 = vunpack.c.h.b16 %v1514
        %v1561 = vunpack.c.l.b16 %v1515
        %v1562 = vunpack.c.h.b16 %v1515
        %v1563 = vunpack.c.l.b16 %v1516
        %v1564 = vunpack.c.h.b16 %v1516
        %v1565 = vunpack.c.l.b16 %v1517
        %v1566 = vunpack.c.h.b16 %v1517
        %v1567 = vunpack.c.l.b16 %v1518
        %v1568 = vunpack.c.h.b16 %v1518
        %v1569 = vunpack.c.l.b16 %v1519
        %v1570 = vunpack.c.h.b16 %v1519
        %v1571 = vunpack.c.l.b16 %v1520
        %v1572 = vunpack.c.h.b16 %v1520
        %v1573 = vunpack.c.l.b16 %v1521
        %v1574 = vunpack.c.h.b16 %v1521
        %v1575 = vunpack.c.l.b16 %v1522
        %v1576 = vunpack.c.h.b16 %v1522
        %v1577 = vunpack.c.l.b16 %v1523
        %v1578 = vunpack.c.h.b16 %v1523
        %v1579 = vunpack.c.l.b16 %v1524
        %v1580 = vunpack.c.h.b16 %v1524
        %v1581 = vunpack.c.l.b16 %v1525
        %v1582 = vunpack.c.h.b16 %v1525
        %v1583 = vunpack.c.l.b16 %v1526
        %v1584 = vunpack.c.h.b16 %v1526
        %v1585 = vunpack.c.l.b16 %v1527
        %v1586 = vunpack.c.h.b16 %v1527
        %v1587 = vunpack.c.l.b16 %v1528
        %v1588 = vunpack.c.h.b16 %v1528
        %v1589 = vpack.c.b16 %v1559, %v1557
        %v1590 = vpack.c.b16 %v1560, %v1558
        %v1591 = vpack.c.b16 %v1563, %v1561
        %v1592 = vpack.c.b16 %v1564, %v1562
        %v1593 = vpack.c.b16 %v1567, %v1565
        %v1594 = vpack.c.b16 %v1568, %v1566
        %v1595 = vpack.c.b16 %v1571, %v1569
        %v1596 = vpack.c.b16 %v1572, %v1570
        %v1597 = vpack.c.b16 %v1575, %v1573
        %v1598 = vpack.c.b16 %v1576, %v1574
        %v1599 = vpack.c.b16 %v1579, %v1577
        %v1600 = vpack.c.b16 %v1580, %v1578
        %v1601 = vpack.c.b16 %v1583, %v1581
        %v1602 = vpack.c.b16 %v1584, %v1582
        %v1603 = vpack.c.b16 %v1587, %v1585
        %v1604 = vpack.c.b16 %v1588, %v1586
        %1621 = vmatprep.subr.bf16.mxu0 %v1604
        %1622 = vmatpush1.bf16.msra.mxu0 %v1603
        %1623 = vmatprep.subr.bf16.mxu0 %v1602
        %1624 = vmatpush1.bf16.msra.mxu0 %v1601
        %1625 = vmatprep.subr.bf16.mxu0 %v1600
        %1626 = vmatpush1.bf16.msra.mxu0 %v1599
        %1627 = vmatprep.subr.bf16.mxu0 %v1598
        %1628 = vmatpush1.bf16.msra.mxu0 %v1597
        %1629 = vmatprep.subr.bf16.mxu0 %v1596
        %1630 = vmatpush1.bf16.msra.mxu0 %v1595
        %1631 = vmatprep.subr.bf16.mxu0 %v1594
        %1632 = vmatpush1.bf16.msra.mxu0 %v1593
        %1633 = vmatprep.subr.bf16.mxu0 %v1592
        %1634 = vmatpush1.bf16.msra.mxu0 %v1591
        %1635 = vmatprep.subr.bf16.mxu0 %v1590
        %1636 = vmatpush1.bf16.msra.mxu0 %v1589
        %1637 = vmatprep.subr.bf16.mxu0 0
        %1638 = vmatpush2.bf16.msra.mxu0 0
        %1639 = vmatprep.subr.bf16.mxu0 0
        %1640 = vmatpush2.bf16.msra.mxu0 0
        %1641 = vmatprep.subr.bf16.mxu0 0
        %1642 = vmatpush2.bf16.msra.mxu0 0
        %1643 = vmatprep.subr.bf16.mxu0 0
        %1644 = vmatpush2.bf16.msra.mxu0 0
        %1645 = vmatprep.subr.bf16.mxu0 0
        %1646 = vmatpush2.bf16.msra.mxu0 0
        %1647 = vmatprep.subr.bf16.mxu0 0
        %1648 = vmatpush2.bf16.msra.mxu0 0
        %1649 = vmatprep.subr.bf16.mxu0 0
        %1650 = vmatpush2.bf16.msra.mxu0 0
        %1651 = vmatprep.subr.bf16.mxu0 0
        %1652 = vmatpush2.bf16.msra.mxu0 0
        %1653 = vmatprep.mubr.bf16.mxu0 0
        %1654 = vmatmul.mubr.bf16.gmra.mxu0 %v1512
        %v1655 = vpop.f32.mrf.mxu0
        %v1656 = vadd.f32 %v1534, %v1655
        %v1657 = vpop.f32.mrf.mxu0
        %v1658 = vadd.f32 %v1538, %v1657
        %v1659 = vpop.f32.mrf.mxu0
        %v1660 = vadd.f32 %v1534, %v1659
        %v1661 = vpop.f32.mrf.mxu0
        %v1662 = vadd.f32 %v1538, %v1661
        %1663 = vdwg.mxu0
        %v1664 = vmax.f32 %v1656, 0.0
        %v1665 = vmax.f32 %v1658, 0.0
        %v1666 = vmax.f32 %v1660, 0.0
        %v1667 = vmax.f32 %v1662, 0.0
        %v1668 = vpack.c.bf16 %v1666, %v1664
        %v1669 = vpack.c.bf16 %v1667, %v1665
        %v1670 = vld [vmem:[#allocation12] sm:$0xf]
        %v1671 = vld [vmem:[#allocation12 + $0x4] sm:$0xf]
        %v1672 = vld [vmem:[#allocation12 + $0x8] sm:$0xf]
        %v1673 = vld [vmem:[#allocation12 + $0xc] sm:$0xf]
        %v1674 = vld [vmem:[#allocation12 + $0x10] sm:$0xf]
        %v1675 = vld [vmem:[#allocation12 + $0x14] sm:$0xf]
        %v1676 = vld [vmem:[#allocation12 + $0x18] sm:$0xf]
        %v1677 = vld [vmem:[#allocation12 + $0x1c] sm:$0xf]
        %v1678 = vld [vmem:[#allocation12 + $0x20] sm:$0xf]
        %v1679 = vld [vmem:[#allocation12 + $0x24] sm:$0xf]
        %v1680 = vld [vmem:[#allocation12 + $0x28] sm:$0xf]
        %v1681 = vld [vmem:[#allocation12 + $0x2c] sm:$0xf]
        %v1682 = vld [vmem:[#allocation12 + $0x30] sm:$0xf]
        %v1683 = vld [vmem:[#allocation12 + $0x34] sm:$0xf]
        %v1684 = vld [vmem:[#allocation12 + $0x38] sm:$0xf]
        %v1685 = vld [vmem:[#allocation12 + $0x3c] sm:$0xf]
        %v1686 = vld [vmem:[#allocation12 + $0x40] sm:$0xf]
        %v1687 = vld [vmem:[#allocation12 + $0x44] sm:$0xf]
        %v1688 = vld [vmem:[#allocation12 + $0x48] sm:$0xf]
        %v1689 = vld [vmem:[#allocation12 + $0x4c] sm:$0xf]
        %v1690 = vld [vmem:[#allocation12 + $0x50] sm:$0xf]
        %v1691 = vld [vmem:[#allocation12 + $0x54] sm:$0xf]
        %v1692 = vld [vmem:[#allocation12 + $0x58] sm:$0xf]
        %v1693 = vld [vmem:[#allocation12 + $0x5c] sm:$0xf]
        %v1694 = vld [vmem:[#allocation12 + $0x60] sm:$0xf]
        %v1695 = vld [vmem:[#allocation12 + $0x64] sm:$0xf]
        %v1696 = vld [vmem:[#allocation12 + $0x68] sm:$0xf]
        %v1697 = vld [vmem:[#allocation12 + $0x6c] sm:$0xf]
        %v1698 = vld [vmem:[#allocation12 + $0x70] sm:$0xf]
        %v1699 = vld [vmem:[#allocation12 + $0x74] sm:$0xf]
        %v1700 = vld [vmem:[#allocation12 + $0x78] sm:$0xf]
        %v1701 = vld [vmem:[#allocation12 + $0x7c] sm:$0xf]
        %v1702 = vld [vmem:[%s10] sm:$0x1]
        %v1704 = vlaneseq
        %v1705 = vshrl.u32 %v1704, 7
        %v1706 = vsub.s32 0, %v1705
        %v1707 = vrot.slane %v1702, %v1706
        %v1741 = vunpack.c.l.b16 %v1670
        %v1742 = vunpack.c.l.b16 %v1671
        %v1743 = vunpack.c.l.b16 %v1672
        %v1744 = vunpack.c.l.b16 %v1673
        %v1745 = vunpack.c.l.b16 %v1674
        %v1746 = vunpack.c.l.b16 %v1675
        %v1747 = vunpack.c.l.b16 %v1676
        %v1748 = vunpack.c.l.b16 %v1677
        %v1749 = vunpack.c.l.b16 %v1678
        %v1750 = vunpack.c.l.b16 %v1679
        %v1751 = vunpack.c.l.b16 %v1680
        %v1752 = vunpack.c.l.b16 %v1681
        %v1753 = vunpack.c.l.b16 %v1682
        %v1754 = vunpack.c.l.b16 %v1683
        %v1755 = vunpack.c.l.b16 %v1684
        %v1756 = vunpack.c.l.b16 %v1685
        %v1757 = vunpack.c.l.b16 %v1686
        %v1758 = vunpack.c.l.b16 %v1687
        %v1759 = vunpack.c.l.b16 %v1688
        %v1760 = vunpack.c.l.b16 %v1689
        %v1761 = vunpack.c.l.b16 %v1690
        %v1762 = vunpack.c.l.b16 %v1691
        %v1763 = vunpack.c.l.b16 %v1692
        %v1764 = vunpack.c.l.b16 %v1693
        %v1765 = vunpack.c.l.b16 %v1694
        %v1766 = vunpack.c.l.b16 %v1695
        %v1767 = vunpack.c.l.b16 %v1696
        %v1768 = vunpack.c.l.b16 %v1697
        %v1769 = vunpack.c.l.b16 %v1698
        %v1770 = vunpack.c.l.b16 %v1699
        %v1771 = vunpack.c.l.b16 %v1700
        %v1772 = vunpack.c.l.b16 %v1701
        %v1773 = vpack.c.b16 %v1742, %v1741
        %v1774 = vpack.c.b16 %v1744, %v1743
        %v1775 = vpack.c.b16 %v1746, %v1745
        %v1776 = vpack.c.b16 %v1748, %v1747
        %v1777 = vpack.c.b16 %v1750, %v1749
        %v1778 = vpack.c.b16 %v1752, %v1751
        %v1779 = vpack.c.b16 %v1754, %v1753
        %v1780 = vpack.c.b16 %v1756, %v1755
        %v1781 = vpack.c.b16 %v1758, %v1757
        %v1782 = vpack.c.b16 %v1760, %v1759
        %v1783 = vpack.c.b16 %v1762, %v1761
        %v1784 = vpack.c.b16 %v1764, %v1763
        %v1785 = vpack.c.b16 %v1766, %v1765
        %v1786 = vpack.c.b16 %v1768, %v1767
        %v1787 = vpack.c.b16 %v1770, %v1769
        %v1788 = vpack.c.b16 %v1772, %v1771
        %1805 = vmatprep.subr.bf16.mxu0 0
        %1806 = vmatpush1.bf16.msra.mxu0 %v1780
        %1807 = vmatprep.subr.bf16.mxu0 0
        %1808 = vmatpush1.bf16.msra.mxu0 %v1779
        %1809 = vmatprep.subr.bf16.mxu0 0
        %1810 = vmatpush1.bf16.msra.mxu0 %v1778
        %1811 = vmatprep.subr.bf16.mxu0 0
        %1812 = vmatpush1.bf16.msra.mxu0 %v1777
        %1813 = vmatprep.subr.bf16.mxu0 0
        %1814 = vmatpush1.bf16.msra.mxu0 %v1776
        %1815 = vmatprep.subr.bf16.mxu0 0
        %1816 = vmatpush1.bf16.msra.mxu0 %v1775
        %1817 = vmatprep.subr.bf16.mxu0 0
        %1818 = vmatpush1.bf16.msra.mxu0 %v1774
        %1819 = vmatprep.subr.bf16.mxu0 0
        %1820 = vmatpush1.bf16.msra.mxu0 %v1773
        %1821 = vmatprep.subr.bf16.mxu0 0
        %1822 = vmatpush2.bf16.msra.mxu0 %v1788
        %1823 = vmatprep.subr.bf16.mxu0 0
        %1824 = vmatpush2.bf16.msra.mxu0 %v1787
        %1825 = vmatprep.subr.bf16.mxu0 0
        %1826 = vmatpush2.bf16.msra.mxu0 %v1786
        %1827 = vmatprep.subr.bf16.mxu0 0
        %1828 = vmatpush2.bf16.msra.mxu0 %v1785
        %1829 = vmatprep.subr.bf16.mxu0 0
        %1830 = vmatpush2.bf16.msra.mxu0 %v1784
        %1831 = vmatprep.subr.bf16.mxu0 0
        %1832 = vmatpush2.bf16.msra.mxu0 %v1783
        %1833 = vmatprep.subr.bf16.mxu0 0
        %1834 = vmatpush2.bf16.msra.mxu0 %v1782
        %1835 = vmatprep.subr.bf16.mxu0 0
        %1836 = vmatpush2.bf16.msra.mxu0 %v1781
        %1837 = vmatprep.mubr.bf16.mxu0 %v1669
        %1838 = vmatmul.mubr.bf16.gmra.mxu0 %v1668
        %v1839 = vpop.f32.mrf.mxu0
        %v1840 = vadd.f32 %v1707, %v1839
        %v1841 = vpop.f32.mrf.mxu0
        %v1842 = vpop.f32.mrf.mxu0
        %v1843 = vadd.f32 %v1707, %v1842
        %v1844 = vpop.f32.mrf.mxu0
        %1845 = vdwg.mxu0
        %v1846 = vadd.f32 %v1510, %v1840
        %v1847 = vadd.f32 %v1511, %v1843
        %v1848 = vld [vmem:[%s11] sm:$0x1]
        %v1849 = vld [vmem:[%s12] sm:$0x1]
        %1850 = vadd.xlane.f32.xlu0 %v1846
        %v1851 = vpop.xlane.xlu0 %1850
        %1852 = vadd.xlane.f32.xlu0 %v1847
        %v1853 = vpop.xlane.xlu0 %1852
        %v1854 = vmul.f32 %v1851, %v1477
        %v1855 = vmul.f32 %v1853, %v1477
        %v1856 = vsub.f32 %v1846, %v1854
        %v1857 = vsub.f32 %v1847, %v1855
        %v1858 = vmul.f32 %v1856, %v1856
        %v1859 = vmul.f32 %v1857, %v1857
        %1860 = vadd.xlane.f32.xlu0 %v1858
        %v1861 = vpop.xlane.xlu0 %1860
        %1862 = vadd.xlane.f32.xlu0 %v1859
        %v1863 = vpop.xlane.xlu0 %1862
        %v1864 = vmul.f32 %v1861, %v1477
        %v1865 = vmul.f32 %v1863, %v1477
        %v1866 = vadd.f32 %v1864, 1e-06
        %v1867 = vadd.f32 %v1865, 1e-06
        %v1868 = vrsqrt.pop %v1866
        %v1869 = vrsqrt.pop %v1867
        %v1870 = vmul.f32 %v1856, %v1868
        %v1871 = vmul.f32 %v1857, %v1869
        %v1873 = vlaneseq
        %v1874 = vshrl.u32 %v1873, 7
        %v1875 = vsub.s32 0, %v1874
        %v1876 = vrot.slane %v1848, %v1875
        %v1878 = vmul.f32 %v1870, %v1876
        %v1879 = vmul.f32 %v1871, %v1876
        %v1881 = vlaneseq
        %v1882 = vshrl.u32 %v1881, 7
        %v1883 = vsub.s32 0, %v1882
        %v1884 = vrot.slane %v1849, %v1883
        %v1886 = vadd.f32 %v1878, %v1884
        %v1887 = vadd.f32 %v1879, %v1884
        %1888 = vst [vmem:[%s550] sm:$0xff] %v1886
        %1889 = vst [vmem:[%s550 + $0x8] sm:$0xff] %v1887
        %s1890 = sand.u32 %s326, 1
        %s1891 = scalar_lea.sflag [#allocation5], %s1890
        %s1892 = sand.u32 %s326, 1
        %s1893 = smul.addr %s1892, 16
        %s1894 = scalar_lea.vmem [#allocation14], %s1893
        // Predicated region
        $region97: #{tpu_custom_call.1} parent=71 // pred_check
          %p1895 = pneg %p336
        $region98: #{tpu_custom_call.1} parent=71 // pred_check_branch
          %1897 = sbr.rel (%p1895) target = $region100
        $region99: #{tpu_custom_call.1} parent=71 // pred_region
          %s1899 = ssub.s32 256, 256
          %1900 = vsyncadd %s1891, %s1899
          %s1901 = smul.addr %s35, 2
          %s1902 = smul.addr %s1901, 128
          %s1903 = scalar_lea.hbm %s13, %s1902
          %s1904 = sshll.u32 %s1894, 4
          %s1905 = int_to_ptr.vmem [resolvable:$true] %s1904
          %1910 = dma.vmem_to_hbm [thread:$0]  %s1905, 256, %s1903, %s1891, 128, 128, 8
        $region100: #{tpu_custom_call.1} parent=71 // pred_fallthru
          _
      $region72: #{tpu_custom_call.1} parent=5 // pred_fallthru
        _
      %p1911 = scmp.le.s32.totalorder 2, %s30
      // Predicated region
      $region101: #{tpu_custom_call.1} parent=5 // pred_check
        %p1912 = pneg %p1911
      $region102: #{tpu_custom_call.1} parent=5 // pred_check_branch
        %1914 = sbr.rel (%p1912) target = $region104
      $region103: #{tpu_custom_call.1} parent=5 // pred_region
        %s1915 = ssub.s32 %s30, 2
        // Predicated region
        $region105: #{tpu_custom_call.1} parent=103 // pred_check
          %p1916 = pneg %p342
        $region106: #{tpu_custom_call.1} parent=103 // pred_check_branch
          %1918 = sbr.rel (%p1916) target = $region108
        $region107: #{tpu_custom_call.1} parent=103 // pred_region
          %s1919 = sand.u32 %s327, 1
          %s1920 = scalar_lea.sflag [#allocation5], %s1919
          %s1921 = sand.u32 %s327, 1
          %s1922 = smul.addr %s1921, 16
          %s1923 = scalar_lea.vmem [#allocation14], %s1922
          %1924 = dma.done %s1920, 256
        $region108: #{tpu_custom_call.1} parent=103 // pred_fallthru
          _
      $region104: #{tpu_custom_call.1} parent=5 // pred_fallthru
        _
    $region6: #{tpu_custom_call.1} parent=1 // loop_footer
      %s34 = sadd.s32 1, %s30
    $region7: #{tpu_custom_call.1} parent=1 // loop_footer_branch
      %29 = sbr.rel target = $region3
    $region8: #{tpu_custom_call.1} parent=1 // loop_exit
      _
    %1925 = vsyncpa [#allocation4], 1
    %s1926 = scalar_lea.sflag [#allocation4], 1
    %1927 = vsyncpa %s1926, 1
    %1928 = vsyncpa [#allocation7], 1
    %s1929 = scalar_lea.sflag [#allocation7], 1
    %1930 = vsyncpa %s1929, 1
    %1931 = vsyncpa [#allocation10], 1
    %1932 = vsyncpa [#allocation13], 1
    %1933 = vsyncpa [#allocation5], 1
    %s1934 = scalar_lea.sflag [#allocation5], 1
    %1935 = vsyncpa %s1934, 1

</llo_original>
